<compile_context>
chip_gen: v5e
topology: v5e:2x2
jax: 0.10.0
libtpu: 0.0.40
codegen_flags: <defaults>
</compile_context>

<pallas_src>
import jax
import jax.numpy as jnp
from jax import lax
from jax.experimental import pallas as pl
from jax.experimental.pallas import tpu as pltpu

# --- constants from the PyTorch module ---
C = 20          # number of classes
B = 2           # boxes per cell
EPSILON = 1e-06
BATCH_SIZE = 64     # fixed divisor, exactly like the PyTorch module
L_COORD = 5.0
L_NOOBJ = 0.5
D = B * 5 + C       # 30 channels


def _sign(t):
    # torch.sign semantics (sign(0) == 0)
    return jnp.where(t > 0.0, 1.0, jnp.where(t < 0.0, -1.0, 0.0))


def yolo_loss_kernel(p_ref, a_ref, out_ref):
    # p_ref, a_ref: (D, TMr, 128) blocks; out_ref: (1, 8, 128) partial sums.
    f32 = jnp.float32
    n_chunks = p_ref.shape[1] // 8        # static: TMr is a multiple of 8

    def chunk_body(r, acc):
        # 8-sublane chunk -> every live slab below is exactly one vreg.
        row = pl.multiple_of(r * 8, 8)

        def pch(c):
            return p_ref[c, pl.ds(row, 8), :].astype(f32)

        def ach(c):
            return a_ref[c, pl.ds(row, 8), :].astype(f32)

        # ---- hoisted box channels: one load + cast each per chunk ----------
        px = [pch(C + 0 + 5 * j) for j in range(B)]
        py = [pch(C + 1 + 5 * j) for j in range(B)]
        pw = [pch(C + 2 + 5 * j) for j in range(B)]
        ph = [pch(C + 3 + 5 * j) for j in range(B)]
        pc_ = [pch(C + 4 + 5 * j) for j in range(B)]
        ax = [ach(C + 0 + 5 * k) for k in range(B)]
        ay = [ach(C + 1 + 5 * k) for k in range(B)]
        aw = [ach(C + 2 + 5 * k) for k in range(B)]
        ah = [ach(C + 3 + 5 * k) for k in range(B)]
        a_conf0 = ach(C + 4)

        # ground-truth corners / areas, computed once (reused for both j)
        ax1 = [ax[k] - 0.5 * aw[k] for k in range(B)]
        ax2 = [ax[k] + 0.5 * aw[k] for k in range(B)]
        ay1 = [ay[k] - 0.5 * ah[k] for k in range(B)]
        ay2 = [ay[k] + 0.5 * ah[k] for k in range(B)]
        a_area = [aw[k] * ah[k] for k in range(B)]

        # ---- IoU(pred box j, gt box k), max over k --------------------------
        max_iou = []
        for j in range(B):
            px1 = px[j] - 0.5 * pw[j]
            px2 = px[j] + 0.5 * pw[j]
            py1 = py[j] - 0.5 * ph[j]
            py2 = py[j] + 0.5 * ph[j]
            p_area = pw[j] * ph[j]
            best = None
            for k in range(B):
                iw = jnp.maximum(
                    jnp.minimum(px2, ax2[k]) - jnp.maximum(px1, ax1[k]), 0.0)
                ih = jnp.maximum(
                    jnp.minimum(py2, ay2[k]) - jnp.maximum(py1, ay1[k]), 0.0)
                inter = iw * ih
                union = p_area + a_area[k] - inter
                zero_u = union == 0.0
                inter_m = jnp.where(zero_u, 0.0, inter)
                union_s = jnp.where(zero_u, EPSILON, union)
                # divide -> EUP reciprocal (approx=False for exact torch parity)
                iou = inter_m * pl.reciprocal(union_s, approx=True)
                best = iou if best is None else jnp.maximum(best, iou)
            max_iou.append(best)

        # responsible predicted box = argmax_j max_iou[j] (first index on ties)
        resp0 = max_iou[0] >= max_iou[1]
        resp = [resp0, jnp.logical_not(resp0)]
        obj_i = a_conf0 > 0.0
        obj_f = obj_i.astype(f32)

        # ---- fused per-cell loss, object mask factored (oij in {0,1}) -------
        cell = jnp.zeros((8, 128), f32)
        for j in range(B):
            oij = jnp.logical_and(obj_i, resp[j]).astype(f32)
            nij = 1.0 - oij

            pos = (px[j] - ax[j]) ** 2 + (py[j] - ay[j]) ** 2
            # matches torch: sqrt applied to raw targets (masking via oij after)
            spw = _sign(pw[j]) * jnp.sqrt(jnp.abs(pw[j]) + EPSILON)
            sph = _sign(ph[j]) * jnp.sqrt(jnp.abs(ph[j]) + EPSILON)
            dim = (spw - jnp.sqrt(aw[j])) ** 2 + (sph - jnp.sqrt(ah[j])) ** 2

            obj_conf = (pc_[j] - max_iou[j]) ** 2
            noobj_conf = pc_[j] * pc_[j]

            cell = cell + oij * (L_COORD * (pos + dim) + obj_conf) \
                        + (L_NOOBJ * nij) * noobj_conf

        # ---- classification CE: single-pass streaming argmax (strict '>') ---
        p0 = pch(0)
        amax = ach(0)
        lmax = p0
        tgt_logit = p0
        for c in range(1, C):
            a_c = ach(c)
            p_c = pch(c)
            take = a_c > amax                    # strict '>' == first-occurrence
            amax = jnp.where(take, a_c, amax)
            tgt_logit = jnp.where(take, p_c, tgt_logit)
            lmax = jnp.maximum(lmax, p_c)

        sum_exp = jnp.zeros((8, 128), f32)
        for c in range(C):
            sum_exp = sum_exp + jnp.exp(pch(c) - lmax)   # EUP slot

        cell = cell + obj_f * (lmax + jnp.log(sum_exp) - tgt_logit)

        return acc + cell

    partial = lax.fori_loop(0, n_chunks, chunk_body,
                            jnp.zeros((8, 128), jnp.float32))
    out_ref[0] = partial.astype(out_ref.dtype)           # lane-dense (8,128)


def sum_squared_error_loss(p, a, *, tile_rows=256):
    """p, a: (N, S, S, B*5+C) -> scalar loss (matches the PyTorch module)."""
    N, S1, S2, d = p.shape
    assert d == D
    assert tile_rows % 8 == 0
    M = N * S1 * S2

    Mr = -(-M // 128)                        # rows of 128 cells
    groups = -(-Mr // 8)                     # number of 8-sublane groups
    # guarantee >= min(4, groups) grid steps (DMA pipelining + megacore on v7x)
    target_tiles = 4
    TMr = 8 * max(1, -(-groups // target_tiles))
    TMr = max(8, min(TMr, tile_rows))
    Mr_pad = -(-Mr // TMr) * TMr
    M_pad = Mr_pad * 128
    G = Mr_pad // TMr

    def prep(x):
        # Keep native dtype (kernel upcasts in-VMEM) so bf16 callers pay half
        # the HBM bytes.  NOTE (v5e): this transpose+pad costs an extra HBM
        # read+write of both tensors; produce activations channels-first
        # upstream (or feed bf16) if the wrapper relayout shows up in xprof.
        x2 = x.reshape(M, D)
        if M_pad != M:
            # zero-padded cells contribute exactly 0 to every loss term
            x2 = jnp.pad(x2, ((0, M_pad - M), (0, 0)))
        # (D, Mr_pad, 128): channels leading, cells dense on (sublane, lane)
        return x2.T.reshape(D, Mr_pad, 128)

    p3 = prep(p)
    a3 = prep(a)

    partials = pl.pallas_call(
        yolo_loss_kernel,
        out_shape=jax.ShapeDtypeStruct((G, 8, 128), jnp.float32),
        grid=(G,),
        in_specs=[pl.BlockSpec((D, TMr, 128), lambda g: (0, g, 0)),
                  pl.BlockSpec((D, TMr, 128), lambda g: (0, g, 0))],
        out_specs=pl.BlockSpec((1, 8, 128), lambda g: (g, 0, 0)),
        compiler_params=pltpu.CompilerParams(
            dimension_semantics=("parallel",),       # megacore-shardable (v7x)
            vmem_limit_bytes=32 * 1024 * 1024),      # 2 in x 2 buf x ~3.9MB fits
    )(p3, a3)

    # final cross-tile / cross-lane reduction + the module's fixed divisor
    # TODO(synk): BATCH_SIZE is hard-coded to 64 in the PyTorch module,
    # independent of the actual N; kept for exact semantic parity.
    return jnp.sum(partials) / BATCH_SIZE


# ---- pure-JAX reference (same math, no Pallas) for a sanity check ----------
def _reference_loss(p, a):
    N, S1, S2, d = p.shape
    M = N * S1 * S2
    p = p.reshape(M, d).astype(jnp.float32)
    a = a.reshape(M, d).astype(jnp.float32)

    def attr(t, i, j):
        return t[:, C + i + 5 * j:C + i + 5 * j + 1]

    def corners(t, j):
        x, y, w, h = attr(t, 0, j), attr(t, 1, j), attr(t, 2, j), attr(t, 3, j)
        return x - w / 2, x + w / 2, y - h / 2, y + h / 2, w * h

    iou = [[None] * B for _ in range(B)]
    for j in range(B):
        px1, px2, py1, py2, pa = corners(p, j)
        for k in range(B):
            ax1, ax2, ay1, ay2, aa = corners(a, k)
            iw = jnp.maximum(jnp.minimum(px2, ax2) - jnp.maximum(px1, ax1), 0.0)
            ih = jnp.maximum(jnp.minimum(py2, ay2) - jnp.maximum(py1, ay1), 0.0)
            inter = iw * ih
            union = pa + aa - inter
            z = union == 0.0
            iou[j][k] = jnp.where(z, 0.0, inter) / jnp.where(z, EPSILON, union)

    max_iou = [jnp.maximum(iou[j][0], iou[j][1]) for j in range(B)]
    resp = [max_iou[0] >= max_iou[1], max_iou[0] < max_iou[1]]
    obj_i = attr(a, 4, 0) > 0.0

    pos = dim = oc = noc = 0.0
    for j in range(B):
        oij = jnp.logical_and(obj_i, resp[j]).astype(jnp.float32)
        nij = 1.0 - oij
        pos += jnp.sum((oij * (attr(p, 0, j) - attr(a, 0, j))) ** 2)
        pos += jnp.sum((oij * (attr(p, 1, j) - attr(a, 1, j))) ** 2)
        pw, ph = attr(p, 2, j), attr(p, 3, j)
        dim += jnp.sum((oij * (_sign(pw) * jnp.sqrt(jnp.abs(pw) + EPSILON)
                               - jnp.sqrt(attr(a, 2, j)))) ** 2)
        dim += jnp.sum((oij * (_sign(ph) * jnp.sqrt(jnp.abs(ph) + EPSILON)
                               - jnp.sqrt(attr(a, 3, j)))) ** 2)
        oc += jnp.sum((oij * (attr(p, 4, j) - max_iou[j])) ** 2)
        noc += jnp.sum((nij * attr(p, 4, j)) ** 2)

    tgt = jnp.argmax(a[:, :C], axis=-1)
    logits = p[:, :C]
    lse = jax.scipy.special.logsumexp(logits, axis=-1)
    ce = jnp.sum(obj_i[:, 0].astype(jnp.float32)
                 * (lse - jnp.take_along_axis(logits, tgt[:, None], axis=-1)[:, 0]))
    total = L_COORD * (pos + dim) + oc + L_NOOBJ * noc + ce
    return total / BATCH_SIZE


if __name__ == "__main__":
    key = jax.random.PRNGKey(0)
    kp, ka, kc = jax.random.split(key, 3)
    N, S = 2, 7                                        # small YOLOv1-style grid
    shape = (N, S, S, D)                               # (2, 7, 7, 30)

    p = jax.random.normal(kp, shape, dtype=jnp.float32)
    # ground truth: nonnegative (so sqrt(width/height) is well defined),
    # confidence channel > 0 marks object cells.
    a = jax.random.uniform(ka, shape, dtype=jnp.float32)
    conf_mask = (jax.random.uniform(kc, (N, S, S, 1)) > 0.5).astype(jnp.float32)
    a = a.at[..., C + 4].set(a[..., C + 4] * conf_mask[..., 0])
    a = a.at[..., C + 9].set(a[..., C + 9] * conf_mask[..., 0])

    loss = jax.block_until_ready(sum_squared_error_loss(p, a))
    ref = jax.block_until_ready(_reference_loss(p, a))

    assert jnp.isfinite(loss), "non-finite loss"
    # slightly looser than exact parity: the IoU divide uses the EUP approx
    # reciprocal (per perf review); set approx=False for bit-level parity.
    assert jnp.allclose(loss, ref, rtol=2e-3, atol=2e-3), (loss, ref)

    print("KERNEL_OK")
</pallas_src>

<mosaic_0001>
module attributes {stable_mosaic.version = 11 : i64} {
  func.func @yolo_loss_kernel(%arg0: i32, %arg1: memref<30x8x128xf32, #tpu.memory_space<vmem>>, %arg2: memref<30x8x128xf32, #tpu.memory_space<vmem>>, %arg3: memref<1x8x128xf32, #tpu.memory_space<vmem>>) attributes {dimension_semantics = [#tpu.dimension_semantics<parallel>], iteration_bounds = array<i64: 1>, scalar_prefetch = 0 : i64, scratch_operands = 0 : i64, tpu.core_type = #tpu.core_type<tc>, window_params = [{transform_indices = @transform_0, window_bounds = array<i64: 30, 8, 128>}, {transform_indices = @transform_1, window_bounds = array<i64: 30, 8, 128>}, {transform_indices = @transform_2, window_bounds = array<i64: 1, 8, 128>}]} {
    %cst = arith.constant 0.000000e+00 : f32
    %0 = vector.broadcast %cst : f32 to vector<8x128xf32>
    %c0_i32 = arith.constant 0 : i32
    %c8_i32 = arith.constant 8 : i32
    %1 = arith.muli %c0_i32, %c8_i32 : i32
    %2 = tpu.assume_multiple %1, 8 : i32
    %c20 = arith.constant 20 : index
    %3 = arith.index_cast %2 : i32 to index
    %c0 = arith.constant 0 : index
    %4 = vector.load %arg1[%c20, %3, %c0] : memref<30x8x128xf32, #tpu.memory_space<vmem>>, vector<1x8x128xf32>
    %5 = vector.shape_cast %4 : vector<1x8x128xf32> to vector<8x128xf32>
    %c25 = arith.constant 25 : index
    %6 = arith.index_cast %2 : i32 to index
    %c0_0 = arith.constant 0 : index
    %7 = vector.load %arg1[%c25, %6, %c0_0] : memref<30x8x128xf32, #tpu.memory_space<vmem>>, vector<1x8x128xf32>
    %8 = vector.shape_cast %7 : vector<1x8x128xf32> to vector<8x128xf32>
    %c21 = arith.constant 21 : index
    %9 = arith.index_cast %2 : i32 to index
    %c0_1 = arith.constant 0 : index
    %10 = vector.load %arg1[%c21, %9, %c0_1] : memref<30x8x128xf32, #tpu.memory_space<vmem>>, vector<1x8x128xf32>
    %11 = vector.shape_cast %10 : vector<1x8x128xf32> to vector<8x128xf32>
    %c26 = arith.constant 26 : index
    %12 = arith.index_cast %2 : i32 to index
    %c0_2 = arith.constant 0 : index
    %13 = vector.load %arg1[%c26, %12, %c0_2] : memref<30x8x128xf32, #tpu.memory_space<vmem>>, vector<1x8x128xf32>
    %14 = vector.shape_cast %13 : vector<1x8x128xf32> to vector<8x128xf32>
    %c22 = arith.constant 22 : index
    %15 = arith.index_cast %2 : i32 to index
    %c0_3 = arith.constant 0 : index
    %16 = vector.load %arg1[%c22, %15, %c0_3] : memref<30x8x128xf32, #tpu.memory_space<vmem>>, vector<1x8x128xf32>
    %17 = vector.shape_cast %16 : vector<1x8x128xf32> to vector<8x128xf32>
    %c27 = arith.constant 27 : index
    %18 = arith.index_cast %2 : i32 to index
    %c0_4 = arith.constant 0 : index
    %19 = vector.load %arg1[%c27, %18, %c0_4] : memref<30x8x128xf32, #tpu.memory_space<vmem>>, vector<1x8x128xf32>
    %20 = vector.shape_cast %19 : vector<1x8x128xf32> to vector<8x128xf32>
    %c23 = arith.constant 23 : index
    %21 = arith.index_cast %2 : i32 to index
    %c0_5 = arith.constant 0 : index
    %22 = vector.load %arg1[%c23, %21, %c0_5] : memref<30x8x128xf32, #tpu.memory_space<vmem>>, vector<1x8x128xf32>
    %23 = vector.shape_cast %22 : vector<1x8x128xf32> to vector<8x128xf32>
    %c28 = arith.constant 28 : index
    %24 = arith.index_cast %2 : i32 to index
    %c0_6 = arith.constant 0 : index
    %25 = vector.load %arg1[%c28, %24, %c0_6] : memref<30x8x128xf32, #tpu.memory_space<vmem>>, vector<1x8x128xf32>
    %26 = vector.shape_cast %25 : vector<1x8x128xf32> to vector<8x128xf32>
    %c24 = arith.constant 24 : index
    %27 = arith.index_cast %2 : i32 to index
    %c0_7 = arith.constant 0 : index
    %28 = vector.load %arg1[%c24, %27, %c0_7] : memref<30x8x128xf32, #tpu.memory_space<vmem>>, vector<1x8x128xf32>
    %29 = vector.shape_cast %28 : vector<1x8x128xf32> to vector<8x128xf32>
    %c29 = arith.constant 29 : index
    %30 = arith.index_cast %2 : i32 to index
    %c0_8 = arith.constant 0 : index
    %31 = vector.load %arg1[%c29, %30, %c0_8] : memref<30x8x128xf32, #tpu.memory_space<vmem>>, vector<1x8x128xf32>
    %32 = vector.shape_cast %31 : vector<1x8x128xf32> to vector<8x128xf32>
    %c20_9 = arith.constant 20 : index
    %33 = arith.index_cast %2 : i32 to index
    %c0_10 = arith.constant 0 : index
    %34 = vector.load %arg2[%c20_9, %33, %c0_10] : memref<30x8x128xf32, #tpu.memory_space<vmem>>, vector<1x8x128xf32>
    %35 = vector.shape_cast %34 : vector<1x8x128xf32> to vector<8x128xf32>
    %c25_11 = arith.constant 25 : index
    %36 = arith.index_cast %2 : i32 to index
    %c0_12 = arith.constant 0 : index
    %37 = vector.load %arg2[%c25_11, %36, %c0_12] : memref<30x8x128xf32, #tpu.memory_space<vmem>>, vector<1x8x128xf32>
    %38 = vector.shape_cast %37 : vector<1x8x128xf32> to vector<8x128xf32>
    %c21_13 = arith.constant 21 : index
    %39 = arith.index_cast %2 : i32 to index
    %c0_14 = arith.constant 0 : index
    %40 = vector.load %arg2[%c21_13, %39, %c0_14] : memref<30x8x128xf32, #tpu.memory_space<vmem>>, vector<1x8x128xf32>
    %41 = vector.shape_cast %40 : vector<1x8x128xf32> to vector<8x128xf32>
    %c26_15 = arith.constant 26 : index
    %42 = arith.index_cast %2 : i32 to index
    %c0_16 = arith.constant 0 : index
    %43 = vector.load %arg2[%c26_15, %42, %c0_16] : memref<30x8x128xf32, #tpu.memory_space<vmem>>, vector<1x8x128xf32>
    %44 = vector.shape_cast %43 : vector<1x8x128xf32> to vector<8x128xf32>
    %c22_17 = arith.constant 22 : index
    %45 = arith.index_cast %2 : i32 to index
    %c0_18 = arith.constant 0 : index
    %46 = vector.load %arg2[%c22_17, %45, %c0_18] : memref<30x8x128xf32, #tpu.memory_space<vmem>>, vector<1x8x128xf32>
    %47 = vector.shape_cast %46 : vector<1x8x128xf32> to vector<8x128xf32>
    %c27_19 = arith.constant 27 : index
    %48 = arith.index_cast %2 : i32 to index
    %c0_20 = arith.constant 0 : index
    %49 = vector.load %arg2[%c27_19, %48, %c0_20] : memref<30x8x128xf32, #tpu.memory_space<vmem>>, vector<1x8x128xf32>
    %50 = vector.shape_cast %49 : vector<1x8x128xf32> to vector<8x128xf32>
    %c23_21 = arith.constant 23 : index
    %51 = arith.index_cast %2 : i32 to index
    %c0_22 = arith.constant 0 : index
    %52 = vector.load %arg2[%c23_21, %51, %c0_22] : memref<30x8x128xf32, #tpu.memory_space<vmem>>, vector<1x8x128xf32>
    %53 = vector.shape_cast %52 : vector<1x8x128xf32> to vector<8x128xf32>
    %c28_23 = arith.constant 28 : index
    %54 = arith.index_cast %2 : i32 to index
    %c0_24 = arith.constant 0 : index
    %55 = vector.load %arg2[%c28_23, %54, %c0_24] : memref<30x8x128xf32, #tpu.memory_space<vmem>>, vector<1x8x128xf32>
    %56 = vector.shape_cast %55 : vector<1x8x128xf32> to vector<8x128xf32>
    %c24_25 = arith.constant 24 : index
    %57 = arith.index_cast %2 : i32 to index
    %c0_26 = arith.constant 0 : index
    %58 = vector.load %arg2[%c24_25, %57, %c0_26] : memref<30x8x128xf32, #tpu.memory_space<vmem>>, vector<1x8x128xf32>
    %59 = vector.shape_cast %58 : vector<1x8x128xf32> to vector<8x128xf32>
    %cst_27 = arith.constant 5.000000e-01 : f32
    %60 = vector.broadcast %cst_27 : f32 to vector<8x128xf32>
    %61 = arith.mulf %60, %47 : vector<8x128xf32>
    %62 = arith.subf %35, %61 : vector<8x128xf32>
    %cst_28 = arith.constant 5.000000e-01 : f32
    %63 = vector.broadcast %cst_28 : f32 to vector<8x128xf32>
    %64 = arith.mulf %63, %50 : vector<8x128xf32>
    %65 = arith.subf %38, %64 : vector<8x128xf32>
    %cst_29 = arith.constant 5.000000e-01 : f32
    %66 = vector.broadcast %cst_29 : f32 to vector<8x128xf32>
    %67 = arith.mulf %66, %47 : vector<8x128xf32>
    %68 = arith.addf %35, %67 : vector<8x128xf32>
    %cst_30 = arith.constant 5.000000e-01 : f32
    %69 = vector.broadcast %cst_30 : f32 to vector<8x128xf32>
    %70 = arith.mulf %69, %50 : vector<8x128xf32>
    %71 = arith.addf %38, %70 : vector<8x128xf32>
    %cst_31 = arith.constant 5.000000e-01 : f32
    %72 = vector.broadcast %cst_31 : f32 to vector<8x128xf32>
    %73 = arith.mulf %72, %53 : vector<8x128xf32>
    %74 = arith.subf %41, %73 : vector<8x128xf32>
    %cst_32 = arith.constant 5.000000e-01 : f32
    %75 = vector.broadcast %cst_32 : f32 to vector<8x128xf32>
    %76 = arith.mulf %75, %56 : vector<8x128xf32>
    %77 = arith.subf %44, %76 : vector<8x128xf32>
    %cst_33 = arith.constant 5.000000e-01 : f32
    %78 = vector.broadcast %cst_33 : f32 to vector<8x128xf32>
    %79 = arith.mulf %78, %53 : vector<8x128xf32>
    %80 = arith.addf %41, %79 : vector<8x128xf32>
    %cst_34 = arith.constant 5.000000e-01 : f32
    %81 = vector.broadcast %cst_34 : f32 to vector<8x128xf32>
    %82 = arith.mulf %81, %56 : vector<8x128xf32>
    %83 = arith.addf %44, %82 : vector<8x128xf32>
    %84 = arith.mulf %47, %53 : vector<8x128xf32>
    %85 = arith.mulf %50, %56 : vector<8x128xf32>
    %cst_35 = arith.constant 5.000000e-01 : f32
    %86 = vector.broadcast %cst_35 : f32 to vector<8x128xf32>
    %87 = arith.mulf %86, %17 : vector<8x128xf32>
    %88 = arith.subf %5, %87 : vector<8x128xf32>
    %cst_36 = arith.constant 5.000000e-01 : f32
    %89 = vector.broadcast %cst_36 : f32 to vector<8x128xf32>
    %90 = arith.mulf %89, %17 : vector<8x128xf32>
    %91 = arith.addf %5, %90 : vector<8x128xf32>
    %cst_37 = arith.constant 5.000000e-01 : f32
    %92 = vector.broadcast %cst_37 : f32 to vector<8x128xf32>
    %93 = arith.mulf %92, %23 : vector<8x128xf32>
    %94 = arith.subf %11, %93 : vector<8x128xf32>
    %cst_38 = arith.constant 5.000000e-01 : f32
    %95 = vector.broadcast %cst_38 : f32 to vector<8x128xf32>
    %96 = arith.mulf %95, %23 : vector<8x128xf32>
    %97 = arith.addf %11, %96 : vector<8x128xf32>
    %98 = arith.mulf %17, %23 : vector<8x128xf32>
    %99 = arith.minimumf %91, %68 : vector<8x128xf32>
    %100 = arith.maximumf %88, %62 : vector<8x128xf32>
    %101 = arith.subf %99, %100 : vector<8x128xf32>
    %cst_39 = arith.constant 0.000000e+00 : f32
    %102 = vector.broadcast %cst_39 : f32 to vector<8x128xf32>
    %103 = arith.maximumf %101, %102 : vector<8x128xf32>
    %104 = arith.minimumf %97, %80 : vector<8x128xf32>
    %105 = arith.maximumf %94, %74 : vector<8x128xf32>
    %106 = arith.subf %104, %105 : vector<8x128xf32>
    %cst_40 = arith.constant 0.000000e+00 : f32
    %107 = vector.broadcast %cst_40 : f32 to vector<8x128xf32>
    %108 = arith.maximumf %106, %107 : vector<8x128xf32>
    %109 = arith.mulf %103, %108 : vector<8x128xf32>
    %110 = arith.addf %98, %84 : vector<8x128xf32>
    %111 = arith.subf %110, %109 : vector<8x128xf32>
    %cst_41 = arith.constant 0.000000e+00 : f32
    %112 = vector.broadcast %cst_41 : f32 to vector<8x128xf32>
    %113 = arith.cmpf oeq, %111, %112 : vector<8x128xf32>
    %cst_42 = arith.constant 0.000000e+00 : f32
    %114 = vector.broadcast %cst_42 : f32 to vector<8x128xf32>
    %115 = arith.select %113, %114, %109 : vector<8x128xi1>, vector<8x128xf32>
    %cst_43 = arith.constant 9.99999997E-7 : f32
    %116 = vector.broadcast %cst_43 : f32 to vector<8x128xf32>
    %117 = arith.select %113, %116, %111 : vector<8x128xi1>, vector<8x128xf32>
    %118 = tpu.reciprocal %117 {approx = true} : vector<8x128xf32> -> vector<8x128xf32>
    %119 = arith.mulf %115, %118 : vector<8x128xf32>
    %120 = arith.minimumf %91, %71 : vector<8x128xf32>
    %121 = arith.maximumf %88, %65 : vector<8x128xf32>
    %122 = arith.subf %120, %121 : vector<8x128xf32>
    %cst_44 = arith.constant 0.000000e+00 : f32
    %123 = vector.broadcast %cst_44 : f32 to vector<8x128xf32>
    %124 = arith.maximumf %122, %123 : vector<8x128xf32>
    %125 = arith.minimumf %97, %83 : vector<8x128xf32>
    %126 = arith.maximumf %94, %77 : vector<8x128xf32>
    %127 = arith.subf %125, %126 : vector<8x128xf32>
    %cst_45 = arith.constant 0.000000e+00 : f32
    %128 = vector.broadcast %cst_45 : f32 to vector<8x128xf32>
    %129 = arith.maximumf %127, %128 : vector<8x128xf32>
    %130 = arith.mulf %124, %129 : vector<8x128xf32>
    %131 = arith.addf %98, %85 : vector<8x128xf32>
    %132 = arith.subf %131, %130 : vector<8x128xf32>
    %cst_46 = arith.constant 0.000000e+00 : f32
    %133 = vector.broadcast %cst_46 : f32 to vector<8x128xf32>
    %134 = arith.cmpf oeq, %132, %133 : vector<8x128xf32>
    %cst_47 = arith.constant 0.000000e+00 : f32
    %135 = vector.broadcast %cst_47 : f32 to vector<8x128xf32>
    %136 = arith.select %134, %135, %130 : vector<8x128xi1>, vector<8x128xf32>
    %cst_48 = arith.constant 9.99999997E-7 : f32
    %137 = vector.broadcast %cst_48 : f32 to vector<8x128xf32>
    %138 = arith.select %134, %137, %132 : vector<8x128xi1>, vector<8x128xf32>
    %139 = tpu.reciprocal %138 {approx = true} : vector<8x128xf32> -> vector<8x128xf32>
    %140 = arith.mulf %136, %139 : vector<8x128xf32>
    %141 = arith.maximumf %119, %140 : vector<8x128xf32>
    %cst_49 = arith.constant 5.000000e-01 : f32
    %142 = vector.broadcast %cst_49 : f32 to vector<8x128xf32>
    %143 = arith.mulf %142, %20 : vector<8x128xf32>
    %144 = arith.subf %8, %143 : vector<8x128xf32>
    %cst_50 = arith.constant 5.000000e-01 : f32
    %145 = vector.broadcast %cst_50 : f32 to vector<8x128xf32>
    %146 = arith.mulf %145, %20 : vector<8x128xf32>
    %147 = arith.addf %8, %146 : vector<8x128xf32>
    %cst_51 = arith.constant 5.000000e-01 : f32
    %148 = vector.broadcast %cst_51 : f32 to vector<8x128xf32>
    %149 = arith.mulf %148, %26 : vector<8x128xf32>
    %150 = arith.subf %14, %149 : vector<8x128xf32>
    %cst_52 = arith.constant 5.000000e-01 : f32
    %151 = vector.broadcast %cst_52 : f32 to vector<8x128xf32>
    %152 = arith.mulf %151, %26 : vector<8x128xf32>
    %153 = arith.addf %14, %152 : vector<8x128xf32>
    %154 = arith.mulf %20, %26 : vector<8x128xf32>
    %155 = arith.minimumf %147, %68 : vector<8x128xf32>
    %156 = arith.maximumf %144, %62 : vector<8x128xf32>
    %157 = arith.subf %155, %156 : vector<8x128xf32>
    %cst_53 = arith.constant 0.000000e+00 : f32
    %158 = vector.broadcast %cst_53 : f32 to vector<8x128xf32>
    %159 = arith.maximumf %157, %158 : vector<8x128xf32>
    %160 = arith.minimumf %153, %80 : vector<8x128xf32>
    %161 = arith.maximumf %150, %74 : vector<8x128xf32>
    %162 = arith.subf %160, %161 : vector<8x128xf32>
    %cst_54 = arith.constant 0.000000e+00 : f32
    %163 = vector.broadcast %cst_54 : f32 to vector<8x128xf32>
    %164 = arith.maximumf %162, %163 : vector<8x128xf32>
    %165 = arith.mulf %159, %164 : vector<8x128xf32>
    %166 = arith.addf %154, %84 : vector<8x128xf32>
    %167 = arith.subf %166, %165 : vector<8x128xf32>
    %cst_55 = arith.constant 0.000000e+00 : f32
    %168 = vector.broadcast %cst_55 : f32 to vector<8x128xf32>
    %169 = arith.cmpf oeq, %167, %168 : vector<8x128xf32>
    %cst_56 = arith.constant 0.000000e+00 : f32
    %170 = vector.broadcast %cst_56 : f32 to vector<8x128xf32>
    %171 = arith.select %169, %170, %165 : vector<8x128xi1>, vector<8x128xf32>
    %cst_57 = arith.constant 9.99999997E-7 : f32
    %172 = vector.broadcast %cst_57 : f32 to vector<8x128xf32>
    %173 = arith.select %169, %172, %167 : vector<8x128xi1>, vector<8x128xf32>
    %174 = tpu.reciprocal %173 {approx = true} : vector<8x128xf32> -> vector<8x128xf32>
    %175 = arith.mulf %171, %174 : vector<8x128xf32>
    %176 = arith.minimumf %147, %71 : vector<8x128xf32>
    %177 = arith.maximumf %144, %65 : vector<8x128xf32>
    %178 = arith.subf %176, %177 : vector<8x128xf32>
    %cst_58 = arith.constant 0.000000e+00 : f32
    %179 = vector.broadcast %cst_58 : f32 to vector<8x128xf32>
    %180 = arith.maximumf %178, %179 : vector<8x128xf32>
    %181 = arith.minimumf %153, %83 : vector<8x128xf32>
    %182 = arith.maximumf %150, %77 : vector<8x128xf32>
    %183 = arith.subf %181, %182 : vector<8x128xf32>
    %cst_59 = arith.constant 0.000000e+00 : f32
    %184 = vector.broadcast %cst_59 : f32 to vector<8x128xf32>
    %185 = arith.maximumf %183, %184 : vector<8x128xf32>
    %186 = arith.mulf %180, %185 : vector<8x128xf32>
    %187 = arith.addf %154, %85 : vector<8x128xf32>
    %188 = arith.subf %187, %186 : vector<8x128xf32>
    %cst_60 = arith.constant 0.000000e+00 : f32
    %189 = vector.broadcast %cst_60 : f32 to vector<8x128xf32>
    %190 = arith.cmpf oeq, %188, %189 : vector<8x128xf32>
    %cst_61 = arith.constant 0.000000e+00 : f32
    %191 = vector.broadcast %cst_61 : f32 to vector<8x128xf32>
    %192 = arith.select %190, %191, %186 : vector<8x128xi1>, vector<8x128xf32>
    %cst_62 = arith.constant 9.99999997E-7 : f32
    %193 = vector.broadcast %cst_62 : f32 to vector<8x128xf32>
    %194 = arith.select %190, %193, %188 : vector<8x128xi1>, vector<8x128xf32>
    %195 = tpu.reciprocal %194 {approx = true} : vector<8x128xf32> -> vector<8x128xf32>
    %196 = arith.mulf %192, %195 : vector<8x128xf32>
    %197 = arith.maximumf %175, %196 : vector<8x128xf32>
    %198 = arith.cmpf oge, %141, %197 : vector<8x128xf32>
    %cst_63 = arith.constant dense<true> : vector<8x128xi1>
    %199 = arith.xori %198, %cst_63 : vector<8x128xi1>
    %cst_64 = arith.constant 0.000000e+00 : f32
    %200 = vector.broadcast %cst_64 : f32 to vector<8x128xf32>
    %201 = arith.cmpf ogt, %59, %200 : vector<8x128xf32>
    %202 = arith.extui %201 : vector<8x128xi1> to vector<8x128xi32>
    %203 = arith.sitofp %202 : vector<8x128xi32> to vector<8x128xf32>
    %cst_65 = arith.constant 0.000000e+00 : f32
    %204 = vector.broadcast %cst_65 : f32 to vector<8x128xf32>
    %205 = arith.andi %201, %198 : vector<8x128xi1>
    %206 = arith.extui %205 : vector<8x128xi1> to vector<8x128xi32>
    %207 = arith.sitofp %206 : vector<8x128xi32> to vector<8x128xf32>
    %cst_66 = arith.constant 1.000000e+00 : f32
    %208 = vector.broadcast %cst_66 : f32 to vector<8x128xf32>
    %209 = arith.subf %208, %207 : vector<8x128xf32>
    %210 = arith.subf %5, %35 : vector<8x128xf32>
    %211 = arith.mulf %210, %210 : vector<8x128xf32>
    %212 = arith.subf %11, %41 : vector<8x128xf32>
    %213 = arith.mulf %212, %212 : vector<8x128xf32>
    %214 = arith.addf %211, %213 : vector<8x128xf32>
    %cst_67 = arith.constant 0.000000e+00 : f32
    %215 = vector.broadcast %cst_67 : f32 to vector<8x128xf32>
    %216 = arith.cmpf ogt, %17, %215 : vector<8x128xf32>
    %cst_68 = arith.constant 0.000000e+00 : f32
    %217 = vector.broadcast %cst_68 : f32 to vector<8x128xf32>
    %218 = arith.cmpf olt, %17, %217 : vector<8x128xf32>
    %cst_69 = arith.constant -1.000000e+00 : f32
    %cst_70 = arith.constant 0.000000e+00 : f32
    %219 = vector.broadcast %cst_69 : f32 to vector<8x128xf32>
    %220 = vector.broadcast %cst_70 : f32 to vector<8x128xf32>
    %221 = arith.select %218, %219, %220 : vector<8x128xi1>, vector<8x128xf32>
    %cst_71 = arith.constant 1.000000e+00 : f32
    %222 = vector.broadcast %cst_71 : f32 to vector<8x128xf32>
    %223 = arith.select %216, %222, %221 : vector<8x128xi1>, vector<8x128xf32>
    %224 = math.absf %17 : vector<8x128xf32>
    %cst_72 = arith.constant 9.99999997E-7 : f32
    %225 = vector.broadcast %cst_72 : f32 to vector<8x128xf32>
    %226 = arith.addf %224, %225 : vector<8x128xf32>
    %227 = math.sqrt %226 : vector<8x128xf32>
    %228 = arith.mulf %223, %227 : vector<8x128xf32>
    %cst_73 = arith.constant 0.000000e+00 : f32
    %229 = vector.broadcast %cst_73 : f32 to vector<8x128xf32>
    %230 = arith.cmpf ogt, %23, %229 : vector<8x128xf32>
    %cst_74 = arith.constant 0.000000e+00 : f32
    %231 = vector.broadcast %cst_74 : f32 to vector<8x128xf32>
    %232 = arith.cmpf olt, %23, %231 : vector<8x128xf32>
    %cst_75 = arith.constant -1.000000e+00 : f32
    %cst_76 = arith.constant 0.000000e+00 : f32
    %233 = vector.broadcast %cst_75 : f32 to vector<8x128xf32>
    %234 = vector.broadcast %cst_76 : f32 to vector<8x128xf32>
    %235 = arith.select %232, %233, %234 : vector<8x128xi1>, vector<8x128xf32>
    %cst_77 = arith.constant 1.000000e+00 : f32
    %236 = vector.broadcast %cst_77 : f32 to vector<8x128xf32>
    %237 = arith.select %230, %236, %235 : vector<8x128xi1>, vector<8x128xf32>
    %238 = math.absf %23 : vector<8x128xf32>
    %cst_78 = arith.constant 9.99999997E-7 : f32
    %239 = vector.broadcast %cst_78 : f32 to vector<8x128xf32>
    %240 = arith.addf %238, %239 : vector<8x128xf32>
    %241 = math.sqrt %240 : vector<8x128xf32>
    %242 = arith.mulf %237, %241 : vector<8x128xf32>
    %243 = math.sqrt %47 : vector<8x128xf32>
    %244 = arith.subf %228, %243 : vector<8x128xf32>
    %245 = arith.mulf %244, %244 : vector<8x128xf32>
    %246 = math.sqrt %53 : vector<8x128xf32>
    %247 = arith.subf %242, %246 : vector<8x128xf32>
    %248 = arith.mulf %247, %247 : vector<8x128xf32>
    %249 = arith.addf %245, %248 : vector<8x128xf32>
    %250 = arith.subf %29, %141 : vector<8x128xf32>
    %251 = arith.mulf %250, %250 : vector<8x128xf32>
    %252 = arith.mulf %29, %29 : vector<8x128xf32>
    %253 = arith.addf %214, %249 : vector<8x128xf32>
    %cst_79 = arith.constant 5.000000e+00 : f32
    %254 = vector.broadcast %cst_79 : f32 to vector<8x128xf32>
    %255 = arith.mulf %254, %253 : vector<8x128xf32>
    %256 = arith.addf %255, %251 : vector<8x128xf32>
    %257 = arith.mulf %207, %256 : vector<8x128xf32>
    %258 = arith.addf %204, %257 : vector<8x128xf32>
    %cst_80 = arith.constant 5.000000e-01 : f32
    %259 = vector.broadcast %cst_80 : f32 to vector<8x128xf32>
    %260 = arith.mulf %259, %209 : vector<8x128xf32>
    %261 = arith.mulf %260, %252 : vector<8x128xf32>
    %262 = arith.addf %258, %261 : vector<8x128xf32>
    %263 = arith.andi %201, %199 : vector<8x128xi1>
    %264 = arith.extui %263 : vector<8x128xi1> to vector<8x128xi32>
    %265 = arith.sitofp %264 : vector<8x128xi32> to vector<8x128xf32>
    %cst_81 = arith.constant 1.000000e+00 : f32
    %266 = vector.broadcast %cst_81 : f32 to vector<8x128xf32>
    %267 = arith.subf %266, %265 : vector<8x128xf32>
    %268 = arith.subf %8, %38 : vector<8x128xf32>
    %269 = arith.mulf %268, %268 : vector<8x128xf32>
    %270 = arith.subf %14, %44 : vector<8x128xf32>
    %271 = arith.mulf %270, %270 : vector<8x128xf32>
    %272 = arith.addf %269, %271 : vector<8x128xf32>
    %cst_82 = arith.constant 0.000000e+00 : f32
    %273 = vector.broadcast %cst_82 : f32 to vector<8x128xf32>
    %274 = arith.cmpf ogt, %20, %273 : vector<8x128xf32>
    %cst_83 = arith.constant 0.000000e+00 : f32
    %275 = vector.broadcast %cst_83 : f32 to vector<8x128xf32>
    %276 = arith.cmpf olt, %20, %275 : vector<8x128xf32>
    %cst_84 = arith.constant -1.000000e+00 : f32
    %cst_85 = arith.constant 0.000000e+00 : f32
    %277 = vector.broadcast %cst_84 : f32 to vector<8x128xf32>
    %278 = vector.broadcast %cst_85 : f32 to vector<8x128xf32>
    %279 = arith.select %276, %277, %278 : vector<8x128xi1>, vector<8x128xf32>
    %cst_86 = arith.constant 1.000000e+00 : f32
    %280 = vector.broadcast %cst_86 : f32 to vector<8x128xf32>
    %281 = arith.select %274, %280, %279 : vector<8x128xi1>, vector<8x128xf32>
    %282 = math.absf %20 : vector<8x128xf32>
    %cst_87 = arith.constant 9.99999997E-7 : f32
    %283 = vector.broadcast %cst_87 : f32 to vector<8x128xf32>
    %284 = arith.addf %282, %283 : vector<8x128xf32>
    %285 = math.sqrt %284 : vector<8x128xf32>
    %286 = arith.mulf %281, %285 : vector<8x128xf32>
    %cst_88 = arith.constant 0.000000e+00 : f32
    %287 = vector.broadcast %cst_88 : f32 to vector<8x128xf32>
    %288 = arith.cmpf ogt, %26, %287 : vector<8x128xf32>
    %cst_89 = arith.constant 0.000000e+00 : f32
    %289 = vector.broadcast %cst_89 : f32 to vector<8x128xf32>
    %290 = arith.cmpf olt, %26, %289 : vector<8x128xf32>
    %cst_90 = arith.constant -1.000000e+00 : f32
    %cst_91 = arith.constant 0.000000e+00 : f32
    %291 = vector.broadcast %cst_90 : f32 to vector<8x128xf32>
    %292 = vector.broadcast %cst_91 : f32 to vector<8x128xf32>
    %293 = arith.select %290, %291, %292 : vector<8x128xi1>, vector<8x128xf32>
    %cst_92 = arith.constant 1.000000e+00 : f32
    %294 = vector.broadcast %cst_92 : f32 to vector<8x128xf32>
    %295 = arith.select %288, %294, %293 : vector<8x128xi1>, vector<8x128xf32>
    %296 = math.absf %26 : vector<8x128xf32>
    %cst_93 = arith.constant 9.99999997E-7 : f32
    %297 = vector.broadcast %cst_93 : f32 to vector<8x128xf32>
    %298 = arith.addf %296, %297 : vector<8x128xf32>
    %299 = math.sqrt %298 : vector<8x128xf32>
    %300 = arith.mulf %295, %299 : vector<8x128xf32>
    %301 = math.sqrt %50 : vector<8x128xf32>
    %302 = arith.subf %286, %301 : vector<8x128xf32>
    %303 = arith.mulf %302, %302 : vector<8x128xf32>
    %304 = math.sqrt %56 : vector<8x128xf32>
    %305 = arith.subf %300, %304 : vector<8x128xf32>
    %306 = arith.mulf %305, %305 : vector<8x128xf32>
    %307 = arith.addf %303, %306 : vector<8x128xf32>
    %308 = arith.subf %32, %197 : vector<8x128xf32>
    %309 = arith.mulf %308, %308 : vector<8x128xf32>
    %310 = arith.mulf %32, %32 : vector<8x128xf32>
    %311 = arith.addf %272, %307 : vector<8x128xf32>
    %cst_94 = arith.constant 5.000000e+00 : f32
    %312 = vector.broadcast %cst_94 : f32 to vector<8x128xf32>
    %313 = arith.mulf %312, %311 : vector<8x128xf32>
    %314 = arith.addf %313, %309 : vector<8x128xf32>
    %315 = arith.mulf %265, %314 : vector<8x128xf32>
    %316 = arith.addf %262, %315 : vector<8x128xf32>
    %cst_95 = arith.constant 5.000000e-01 : f32
    %317 = vector.broadcast %cst_95 : f32 to vector<8x128xf32>
    %318 = arith.mulf %317, %267 : vector<8x128xf32>
    %319 = arith.mulf %318, %310 : vector<8x128xf32>
    %320 = arith.addf %316, %319 : vector<8x128xf32>
    %c0_96 = arith.constant 0 : index
    %321 = arith.index_cast %2 : i32 to index
    %c0_97 = arith.constant 0 : index
    %322 = vector.load %arg1[%c0_96, %321, %c0_97] : memref<30x8x128xf32, #tpu.memory_space<vmem>>, vector<1x8x128xf32>
    %323 = vector.shape_cast %322 : vector<1x8x128xf32> to vector<8x128xf32>
    %c0_98 = arith.constant 0 : index
    %324 = arith.index_cast %2 : i32 to index
    %c0_99 = arith.constant 0 : index
    %325 = vector.load %arg2[%c0_98, %324, %c0_99] : memref<30x8x128xf32, #tpu.memory_space<vmem>>, vector<1x8x128xf32>
    %326 = vector.shape_cast %325 : vector<1x8x128xf32> to vector<8x128xf32>
    %c1 = arith.constant 1 : index
    %327 = arith.index_cast %2 : i32 to index
    %c0_100 = arith.constant 0 : index
    %328 = vector.load %arg2[%c1, %327, %c0_100] : memref<30x8x128xf32, #tpu.memory_space<vmem>>, vector<1x8x128xf32>
    %329 = vector.shape_cast %328 : vector<1x8x128xf32> to vector<8x128xf32>
    %c1_101 = arith.constant 1 : index
    %330 = arith.index_cast %2 : i32 to index
    %c0_102 = arith.constant 0 : index
    %331 = vector.load %arg1[%c1_101, %330, %c0_102] : memref<30x8x128xf32, #tpu.memory_space<vmem>>, vector<1x8x128xf32>
    %332 = vector.shape_cast %331 : vector<1x8x128xf32> to vector<8x128xf32>
    %333 = arith.cmpf ogt, %329, %326 : vector<8x128xf32>
    %334 = arith.select %333, %329, %326 : vector<8x128xi1>, vector<8x128xf32>
    %335 = arith.select %333, %332, %323 : vector<8x128xi1>, vector<8x128xf32>
    %336 = arith.maximumf %323, %332 : vector<8x128xf32>
    %c2 = arith.constant 2 : index
    %337 = arith.index_cast %2 : i32 to index
    %c0_103 = arith.constant 0 : index
    %338 = vector.load %arg2[%c2, %337, %c0_103] : memref<30x8x128xf32, #tpu.memory_space<vmem>>, vector<1x8x128xf32>
    %339 = vector.shape_cast %338 : vector<1x8x128xf32> to vector<8x128xf32>
    %c2_104 = arith.constant 2 : index
    %340 = arith.index_cast %2 : i32 to index
    %c0_105 = arith.constant 0 : index
    %341 = vector.load %arg1[%c2_104, %340, %c0_105] : memref<30x8x128xf32, #tpu.memory_space<vmem>>, vector<1x8x128xf32>
    %342 = vector.shape_cast %341 : vector<1x8x128xf32> to vector<8x128xf32>
    %343 = arith.cmpf ogt, %339, %334 : vector<8x128xf32>
    %344 = arith.select %343, %339, %334 : vector<8x128xi1>, vector<8x128xf32>
    %345 = arith.select %343, %342, %335 : vector<8x128xi1>, vector<8x128xf32>
    %346 = arith.maximumf %336, %342 : vector<8x128xf32>
    %c3 = arith.constant 3 : index
    %347 = arith.index_cast %2 : i32 to index
    %c0_106 = arith.constant 0 : index
    %348 = vector.load %arg2[%c3, %347, %c0_106] : memref<30x8x128xf32, #tpu.memory_space<vmem>>, vector<1x8x128xf32>
    %349 = vector.shape_cast %348 : vector<1x8x128xf32> to vector<8x128xf32>
    %c3_107 = arith.constant 3 : index
    %350 = arith.index_cast %2 : i32 to index
    %c0_108 = arith.constant 0 : index
    %351 = vector.load %arg1[%c3_107, %350, %c0_108] : memref<30x8x128xf32, #tpu.memory_space<vmem>>, vector<1x8x128xf32>
    %352 = vector.shape_cast %351 : vector<1x8x128xf32> to vector<8x128xf32>
    %353 = arith.cmpf ogt, %349, %344 : vector<8x128xf32>
    %354 = arith.select %353, %349, %344 : vector<8x128xi1>, vector<8x128xf32>
    %355 = arith.select %353, %352, %345 : vector<8x128xi1>, vector<8x128xf32>
    %356 = arith.maximumf %346, %352 : vector<8x128xf32>
    %c4 = arith.constant 4 : index
    %357 = arith.index_cast %2 : i32 to index
    %c0_109 = arith.constant 0 : index
    %358 = vector.load %arg2[%c4, %357, %c0_109] : memref<30x8x128xf32, #tpu.memory_space<vmem>>, vector<1x8x128xf32>
    %359 = vector.shape_cast %358 : vector<1x8x128xf32> to vector<8x128xf32>
    %c4_110 = arith.constant 4 : index
    %360 = arith.index_cast %2 : i32 to index
    %c0_111 = arith.constant 0 : index
    %361 = vector.load %arg1[%c4_110, %360, %c0_111] : memref<30x8x128xf32, #tpu.memory_space<vmem>>, vector<1x8x128xf32>
    %362 = vector.shape_cast %361 : vector<1x8x128xf32> to vector<8x128xf32>
    %363 = arith.cmpf ogt, %359, %354 : vector<8x128xf32>
    %364 = arith.select %363, %359, %354 : vector<8x128xi1>, vector<8x128xf32>
    %365 = arith.select %363, %362, %355 : vector<8x128xi1>, vector<8x128xf32>
    %366 = arith.maximumf %356, %362 : vector<8x128xf32>
    %c5 = arith.constant 5 : index
    %367 = arith.index_cast %2 : i32 to index
    %c0_112 = arith.constant 0 : index
    %368 = vector.load %arg2[%c5, %367, %c0_112] : memref<30x8x128xf32, #tpu.memory_space<vmem>>, vector<1x8x128xf32>
    %369 = vector.shape_cast %368 : vector<1x8x128xf32> to vector<8x128xf32>
    %c5_113 = arith.constant 5 : index
    %370 = arith.index_cast %2 : i32 to index
    %c0_114 = arith.constant 0 : index
    %371 = vector.load %arg1[%c5_113, %370, %c0_114] : memref<30x8x128xf32, #tpu.memory_space<vmem>>, vector<1x8x128xf32>
    %372 = vector.shape_cast %371 : vector<1x8x128xf32> to vector<8x128xf32>
    %373 = arith.cmpf ogt, %369, %364 : vector<8x128xf32>
    %374 = arith.select %373, %369, %364 : vector<8x128xi1>, vector<8x128xf32>
    %375 = arith.select %373, %372, %365 : vector<8x128xi1>, vector<8x128xf32>
    %376 = arith.maximumf %366, %372 : vector<8x128xf32>
    %c6 = arith.constant 6 : index
    %377 = arith.index_cast %2 : i32 to index
    %c0_115 = arith.constant 0 : index
    %378 = vector.load %arg2[%c6, %377, %c0_115] : memref<30x8x128xf32, #tpu.memory_space<vmem>>, vector<1x8x128xf32>
    %379 = vector.shape_cast %378 : vector<1x8x128xf32> to vector<8x128xf32>
    %c6_116 = arith.constant 6 : index
    %380 = arith.index_cast %2 : i32 to index
    %c0_117 = arith.constant 0 : index
    %381 = vector.load %arg1[%c6_116, %380, %c0_117] : memref<30x8x128xf32, #tpu.memory_space<vmem>>, vector<1x8x128xf32>
    %382 = vector.shape_cast %381 : vector<1x8x128xf32> to vector<8x128xf32>
    %383 = arith.cmpf ogt, %379, %374 : vector<8x128xf32>
    %384 = arith.select %383, %379, %374 : vector<8x128xi1>, vector<8x128xf32>
    %385 = arith.select %383, %382, %375 : vector<8x128xi1>, vector<8x128xf32>
    %386 = arith.maximumf %376, %382 : vector<8x128xf32>
    %c7 = arith.constant 7 : index
    %387 = arith.index_cast %2 : i32 to index
    %c0_118 = arith.constant 0 : index
    %388 = vector.load %arg2[%c7, %387, %c0_118] : memref<30x8x128xf32, #tpu.memory_space<vmem>>, vector<1x8x128xf32>
    %389 = vector.shape_cast %388 : vector<1x8x128xf32> to vector<8x128xf32>
    %c7_119 = arith.constant 7 : index
    %390 = arith.index_cast %2 : i32 to index
    %c0_120 = arith.constant 0 : index
    %391 = vector.load %arg1[%c7_119, %390, %c0_120] : memref<30x8x128xf32, #tpu.memory_space<vmem>>, vector<1x8x128xf32>
    %392 = vector.shape_cast %391 : vector<1x8x128xf32> to vector<8x128xf32>
    %393 = arith.cmpf ogt, %389, %384 : vector<8x128xf32>
    %394 = arith.select %393, %389, %384 : vector<8x128xi1>, vector<8x128xf32>
    %395 = arith.select %393, %392, %385 : vector<8x128xi1>, vector<8x128xf32>
    %396 = arith.maximumf %386, %392 : vector<8x128xf32>
    %c8 = arith.constant 8 : index
    %397 = arith.index_cast %2 : i32 to index
    %c0_121 = arith.constant 0 : index
    %398 = vector.load %arg2[%c8, %397, %c0_121] : memref<30x8x128xf32, #tpu.memory_space<vmem>>, vector<1x8x128xf32>
    %399 = vector.shape_cast %398 : vector<1x8x128xf32> to vector<8x128xf32>
    %c8_122 = arith.constant 8 : index
    %400 = arith.index_cast %2 : i32 to index
    %c0_123 = arith.constant 0 : index
    %401 = vector.load %arg1[%c8_122, %400, %c0_123] : memref<30x8x128xf32, #tpu.memory_space<vmem>>, vector<1x8x128xf32>
    %402 = vector.shape_cast %401 : vector<1x8x128xf32> to vector<8x128xf32>
    %403 = arith.cmpf ogt, %399, %394 : vector<8x128xf32>
    %404 = arith.select %403, %399, %394 : vector<8x128xi1>, vector<8x128xf32>
    %405 = arith.select %403, %402, %395 : vector<8x128xi1>, vector<8x128xf32>
    %406 = arith.maximumf %396, %402 : vector<8x128xf32>
    %c9 = arith.constant 9 : index
    %407 = arith.index_cast %2 : i32 to index
    %c0_124 = arith.constant 0 : index
    %408 = vector.load %arg2[%c9, %407, %c0_124] : memref<30x8x128xf32, #tpu.memory_space<vmem>>, vector<1x8x128xf32>
    %409 = vector.shape_cast %408 : vector<1x8x128xf32> to vector<8x128xf32>
    %c9_125 = arith.constant 9 : index
    %410 = arith.index_cast %2 : i32 to index
    %c0_126 = arith.constant 0 : index
    %411 = vector.load %arg1[%c9_125, %410, %c0_126] : memref<30x8x128xf32, #tpu.memory_space<vmem>>, vector<1x8x128xf32>
    %412 = vector.shape_cast %411 : vector<1x8x128xf32> to vector<8x128xf32>
    %413 = arith.cmpf ogt, %409, %404 : vector<8x128xf32>
    %414 = arith.select %413, %409, %404 : vector<8x128xi1>, vector<8x128xf32>
    %415 = arith.select %413, %412, %405 : vector<8x128xi1>, vector<8x128xf32>
    %416 = arith.maximumf %406, %412 : vector<8x128xf32>
    %c10 = arith.constant 10 : index
    %417 = arith.index_cast %2 : i32 to index
    %c0_127 = arith.constant 0 : index
    %418 = vector.load %arg2[%c10, %417, %c0_127] : memref<30x8x128xf32, #tpu.memory_space<vmem>>, vector<1x8x128xf32>
    %419 = vector.shape_cast %418 : vector<1x8x128xf32> to vector<8x128xf32>
    %c10_128 = arith.constant 10 : index
    %420 = arith.index_cast %2 : i32 to index
    %c0_129 = arith.constant 0 : index
    %421 = vector.load %arg1[%c10_128, %420, %c0_129] : memref<30x8x128xf32, #tpu.memory_space<vmem>>, vector<1x8x128xf32>
    %422 = vector.shape_cast %421 : vector<1x8x128xf32> to vector<8x128xf32>
    %423 = arith.cmpf ogt, %419, %414 : vector<8x128xf32>
    %424 = arith.select %423, %419, %414 : vector<8x128xi1>, vector<8x128xf32>
    %425 = arith.select %423, %422, %415 : vector<8x128xi1>, vector<8x128xf32>
    %426 = arith.maximumf %416, %422 : vector<8x128xf32>
    %c11 = arith.constant 11 : index
    %427 = arith.index_cast %2 : i32 to index
    %c0_130 = arith.constant 0 : index
    %428 = vector.load %arg2[%c11, %427, %c0_130] : memref<30x8x128xf32, #tpu.memory_space<vmem>>, vector<1x8x128xf32>
    %429 = vector.shape_cast %428 : vector<1x8x128xf32> to vector<8x128xf32>
    %c11_131 = arith.constant 11 : index
    %430 = arith.index_cast %2 : i32 to index
    %c0_132 = arith.constant 0 : index
    %431 = vector.load %arg1[%c11_131, %430, %c0_132] : memref<30x8x128xf32, #tpu.memory_space<vmem>>, vector<1x8x128xf32>
    %432 = vector.shape_cast %431 : vector<1x8x128xf32> to vector<8x128xf32>
    %433 = arith.cmpf ogt, %429, %424 : vector<8x128xf32>
    %434 = arith.select %433, %429, %424 : vector<8x128xi1>, vector<8x128xf32>
    %435 = arith.select %433, %432, %425 : vector<8x128xi1>, vector<8x128xf32>
    %436 = arith.maximumf %426, %432 : vector<8x128xf32>
    %c12 = arith.constant 12 : index
    %437 = arith.index_cast %2 : i32 to index
    %c0_133 = arith.constant 0 : index
    %438 = vector.load %arg2[%c12, %437, %c0_133] : memref<30x8x128xf32, #tpu.memory_space<vmem>>, vector<1x8x128xf32>
    %439 = vector.shape_cast %438 : vector<1x8x128xf32> to vector<8x128xf32>
    %c12_134 = arith.constant 12 : index
    %440 = arith.index_cast %2 : i32 to index
    %c0_135 = arith.constant 0 : index
    %441 = vector.load %arg1[%c12_134, %440, %c0_135] : memref<30x8x128xf32, #tpu.memory_space<vmem>>, vector<1x8x128xf32>
    %442 = vector.shape_cast %441 : vector<1x8x128xf32> to vector<8x128xf32>
    %443 = arith.cmpf ogt, %439, %434 : vector<8x128xf32>
    %444 = arith.select %443, %439, %434 : vector<8x128xi1>, vector<8x128xf32>
    %445 = arith.select %443, %442, %435 : vector<8x128xi1>, vector<8x128xf32>
    %446 = arith.maximumf %436, %442 : vector<8x128xf32>
    %c13 = arith.constant 13 : index
    %447 = arith.index_cast %2 : i32 to index
    %c0_136 = arith.constant 0 : index
    %448 = vector.load %arg2[%c13, %447, %c0_136] : memref<30x8x128xf32, #tpu.memory_space<vmem>>, vector<1x8x128xf32>
    %449 = vector.shape_cast %448 : vector<1x8x128xf32> to vector<8x128xf32>
    %c13_137 = arith.constant 13 : index
    %450 = arith.index_cast %2 : i32 to index
    %c0_138 = arith.constant 0 : index
    %451 = vector.load %arg1[%c13_137, %450, %c0_138] : memref<30x8x128xf32, #tpu.memory_space<vmem>>, vector<1x8x128xf32>
    %452 = vector.shape_cast %451 : vector<1x8x128xf32> to vector<8x128xf32>
    %453 = arith.cmpf ogt, %449, %444 : vector<8x128xf32>
    %454 = arith.select %453, %449, %444 : vector<8x128xi1>, vector<8x128xf32>
    %455 = arith.select %453, %452, %445 : vector<8x128xi1>, vector<8x128xf32>
    %456 = arith.maximumf %446, %452 : vector<8x128xf32>
    %c14 = arith.constant 14 : index
    %457 = arith.index_cast %2 : i32 to index
    %c0_139 = arith.constant 0 : index
    %458 = vector.load %arg2[%c14, %457, %c0_139] : memref<30x8x128xf32, #tpu.memory_space<vmem>>, vector<1x8x128xf32>
    %459 = vector.shape_cast %458 : vector<1x8x128xf32> to vector<8x128xf32>
    %c14_140 = arith.constant 14 : index
    %460 = arith.index_cast %2 : i32 to index
    %c0_141 = arith.constant 0 : index
    %461 = vector.load %arg1[%c14_140, %460, %c0_141] : memref<30x8x128xf32, #tpu.memory_space<vmem>>, vector<1x8x128xf32>
    %462 = vector.shape_cast %461 : vector<1x8x128xf32> to vector<8x128xf32>
    %463 = arith.cmpf ogt, %459, %454 : vector<8x128xf32>
    %464 = arith.select %463, %459, %454 : vector<8x128xi1>, vector<8x128xf32>
    %465 = arith.select %463, %462, %455 : vector<8x128xi1>, vector<8x128xf32>
    %466 = arith.maximumf %456, %462 : vector<8x128xf32>
    %c15 = arith.constant 15 : index
    %467 = arith.index_cast %2 : i32 to index
    %c0_142 = arith.constant 0 : index
    %468 = vector.load %arg2[%c15, %467, %c0_142] : memref<30x8x128xf32, #tpu.memory_space<vmem>>, vector<1x8x128xf32>
    %469 = vector.shape_cast %468 : vector<1x8x128xf32> to vector<8x128xf32>
    %c15_143 = arith.constant 15 : index
    %470 = arith.index_cast %2 : i32 to index
    %c0_144 = arith.constant 0 : index
    %471 = vector.load %arg1[%c15_143, %470, %c0_144] : memref<30x8x128xf32, #tpu.memory_space<vmem>>, vector<1x8x128xf32>
    %472 = vector.shape_cast %471 : vector<1x8x128xf32> to vector<8x128xf32>
    %473 = arith.cmpf ogt, %469, %464 : vector<8x128xf32>
    %474 = arith.select %473, %469, %464 : vector<8x128xi1>, vector<8x128xf32>
    %475 = arith.select %473, %472, %465 : vector<8x128xi1>, vector<8x128xf32>
    %476 = arith.maximumf %466, %472 : vector<8x128xf32>
    %c16 = arith.constant 16 : index
    %477 = arith.index_cast %2 : i32 to index
    %c0_145 = arith.constant 0 : index
    %478 = vector.load %arg2[%c16, %477, %c0_145] : memref<30x8x128xf32, #tpu.memory_space<vmem>>, vector<1x8x128xf32>
    %479 = vector.shape_cast %478 : vector<1x8x128xf32> to vector<8x128xf32>
    %c16_146 = arith.constant 16 : index
    %480 = arith.index_cast %2 : i32 to index
    %c0_147 = arith.constant 0 : index
    %481 = vector.load %arg1[%c16_146, %480, %c0_147] : memref<30x8x128xf32, #tpu.memory_space<vmem>>, vector<1x8x128xf32>
    %482 = vector.shape_cast %481 : vector<1x8x128xf32> to vector<8x128xf32>
    %483 = arith.cmpf ogt, %479, %474 : vector<8x128xf32>
    %484 = arith.select %483, %479, %474 : vector<8x128xi1>, vector<8x128xf32>
    %485 = arith.select %483, %482, %475 : vector<8x128xi1>, vector<8x128xf32>
    %486 = arith.maximumf %476, %482 : vector<8x128xf32>
    %c17 = arith.constant 17 : index
    %487 = arith.index_cast %2 : i32 to index
    %c0_148 = arith.constant 0 : index
    %488 = vector.load %arg2[%c17, %487, %c0_148] : memref<30x8x128xf32, #tpu.memory_space<vmem>>, vector<1x8x128xf32>
    %489 = vector.shape_cast %488 : vector<1x8x128xf32> to vector<8x128xf32>
    %c17_149 = arith.constant 17 : index
    %490 = arith.index_cast %2 : i32 to index
    %c0_150 = arith.constant 0 : index
    %491 = vector.load %arg1[%c17_149, %490, %c0_150] : memref<30x8x128xf32, #tpu.memory_space<vmem>>, vector<1x8x128xf32>
    %492 = vector.shape_cast %491 : vector<1x8x128xf32> to vector<8x128xf32>
    %493 = arith.cmpf ogt, %489, %484 : vector<8x128xf32>
    %494 = arith.select %493, %489, %484 : vector<8x128xi1>, vector<8x128xf32>
    %495 = arith.select %493, %492, %485 : vector<8x128xi1>, vector<8x128xf32>
    %496 = arith.maximumf %486, %492 : vector<8x128xf32>
    %c18 = arith.constant 18 : index
    %497 = arith.index_cast %2 : i32 to index
    %c0_151 = arith.constant 0 : index
    %498 = vector.load %arg2[%c18, %497, %c0_151] : memref<30x8x128xf32, #tpu.memory_space<vmem>>, vector<1x8x128xf32>
    %499 = vector.shape_cast %498 : vector<1x8x128xf32> to vector<8x128xf32>
    %c18_152 = arith.constant 18 : index
    %500 = arith.index_cast %2 : i32 to index
    %c0_153 = arith.constant 0 : index
    %501 = vector.load %arg1[%c18_152, %500, %c0_153] : memref<30x8x128xf32, #tpu.memory_space<vmem>>, vector<1x8x128xf32>
    %502 = vector.shape_cast %501 : vector<1x8x128xf32> to vector<8x128xf32>
    %503 = arith.cmpf ogt, %499, %494 : vector<8x128xf32>
    %504 = arith.select %503, %499, %494 : vector<8x128xi1>, vector<8x128xf32>
    %505 = arith.select %503, %502, %495 : vector<8x128xi1>, vector<8x128xf32>
    %506 = arith.maximumf %496, %502 : vector<8x128xf32>
    %c19 = arith.constant 19 : index
    %507 = arith.index_cast %2 : i32 to index
    %c0_154 = arith.constant 0 : index
    %508 = vector.load %arg2[%c19, %507, %c0_154] : memref<30x8x128xf32, #tpu.memory_space<vmem>>, vector<1x8x128xf32>
    %509 = vector.shape_cast %508 : vector<1x8x128xf32> to vector<8x128xf32>
    %c19_155 = arith.constant 19 : index
    %510 = arith.index_cast %2 : i32 to index
    %c0_156 = arith.constant 0 : index
    %511 = vector.load %arg1[%c19_155, %510, %c0_156] : memref<30x8x128xf32, #tpu.memory_space<vmem>>, vector<1x8x128xf32>
    %512 = vector.shape_cast %511 : vector<1x8x128xf32> to vector<8x128xf32>
    %513 = arith.cmpf ogt, %509, %504 : vector<8x128xf32>
    %514 = arith.select %513, %512, %505 : vector<8x128xi1>, vector<8x128xf32>
    %515 = arith.maximumf %506, %512 : vector<8x128xf32>
    %cst_157 = arith.constant 0.000000e+00 : f32
    %516 = vector.broadcast %cst_157 : f32 to vector<8x128xf32>
    %c0_158 = arith.constant 0 : index
    %517 = arith.index_cast %2 : i32 to index
    %c0_159 = arith.constant 0 : index
    %518 = vector.load %arg1[%c0_158, %517, %c0_159] : memref<30x8x128xf32, #tpu.memory_space<vmem>>, vector<1x8x128xf32>
    %519 = vector.shape_cast %518 : vector<1x8x128xf32> to vector<8x128xf32>
    %520 = arith.subf %519, %515 : vector<8x128xf32>
    %521 = math.exp %520 : vector<8x128xf32>
    %522 = arith.addf %516, %521 : vector<8x128xf32>
    %c1_160 = arith.constant 1 : index
    %523 = arith.index_cast %2 : i32 to index
    %c0_161 = arith.constant 0 : index
    %524 = vector.load %arg1[%c1_160, %523, %c0_161] : memref<30x8x128xf32, #tpu.memory_space<vmem>>, vector<1x8x128xf32>
    %525 = vector.shape_cast %524 : vector<1x8x128xf32> to vector<8x128xf32>
    %526 = arith.subf %525, %515 : vector<8x128xf32>
    %527 = math.exp %526 : vector<8x128xf32>
    %528 = arith.addf %522, %527 : vector<8x128xf32>
    %c2_162 = arith.constant 2 : index
    %529 = arith.index_cast %2 : i32 to index
    %c0_163 = arith.constant 0 : index
    %530 = vector.load %arg1[%c2_162, %529, %c0_163] : memref<30x8x128xf32, #tpu.memory_space<vmem>>, vector<1x8x128xf32>
    %531 = vector.shape_cast %530 : vector<1x8x128xf32> to vector<8x128xf32>
    %532 = arith.subf %531, %515 : vector<8x128xf32>
    %533 = math.exp %532 : vector<8x128xf32>
    %534 = arith.addf %528, %533 : vector<8x128xf32>
    %c3_164 = arith.constant 3 : index
    %535 = arith.index_cast %2 : i32 to index
    %c0_165 = arith.constant 0 : index
    %536 = vector.load %arg1[%c3_164, %535, %c0_165] : memref<30x8x128xf32, #tpu.memory_space<vmem>>, vector<1x8x128xf32>
    %537 = vector.shape_cast %536 : vector<1x8x128xf32> to vector<8x128xf32>
    %538 = arith.subf %537, %515 : vector<8x128xf32>
    %539 = math.exp %538 : vector<8x128xf32>
    %540 = arith.addf %534, %539 : vector<8x128xf32>
    %c4_166 = arith.constant 4 : index
    %541 = arith.index_cast %2 : i32 to index
    %c0_167 = arith.constant 0 : index
    %542 = vector.load %arg1[%c4_166, %541, %c0_167] : memref<30x8x128xf32, #tpu.memory_space<vmem>>, vector<1x8x128xf32>
    %543 = vector.shape_cast %542 : vector<1x8x128xf32> to vector<8x128xf32>
    %544 = arith.subf %543, %515 : vector<8x128xf32>
    %545 = math.exp %544 : vector<8x128xf32>
    %546 = arith.addf %540, %545 : vector<8x128xf32>
    %c5_168 = arith.constant 5 : index
    %547 = arith.index_cast %2 : i32 to index
    %c0_169 = arith.constant 0 : index
    %548 = vector.load %arg1[%c5_168, %547, %c0_169] : memref<30x8x128xf32, #tpu.memory_space<vmem>>, vector<1x8x128xf32>
    %549 = vector.shape_cast %548 : vector<1x8x128xf32> to vector<8x128xf32>
    %550 = arith.subf %549, %515 : vector<8x128xf32>
    %551 = math.exp %550 : vector<8x128xf32>
    %552 = arith.addf %546, %551 : vector<8x128xf32>
    %c6_170 = arith.constant 6 : index
    %553 = arith.index_cast %2 : i32 to index
    %c0_171 = arith.constant 0 : index
    %554 = vector.load %arg1[%c6_170, %553, %c0_171] : memref<30x8x128xf32, #tpu.memory_space<vmem>>, vector<1x8x128xf32>
    %555 = vector.shape_cast %554 : vector<1x8x128xf32> to vector<8x128xf32>
    %556 = arith.subf %555, %515 : vector<8x128xf32>
    %557 = math.exp %556 : vector<8x128xf32>
    %558 = arith.addf %552, %557 : vector<8x128xf32>
    %c7_172 = arith.constant 7 : index
    %559 = arith.index_cast %2 : i32 to index
    %c0_173 = arith.constant 0 : index
    %560 = vector.load %arg1[%c7_172, %559, %c0_173] : memref<30x8x128xf32, #tpu.memory_space<vmem>>, vector<1x8x128xf32>
    %561 = vector.shape_cast %560 : vector<1x8x128xf32> to vector<8x128xf32>
    %562 = arith.subf %561, %515 : vector<8x128xf32>
    %563 = math.exp %562 : vector<8x128xf32>
    %564 = arith.addf %558, %563 : vector<8x128xf32>
    %c8_174 = arith.constant 8 : index
    %565 = arith.index_cast %2 : i32 to index
    %c0_175 = arith.constant 0 : index
    %566 = vector.load %arg1[%c8_174, %565, %c0_175] : memref<30x8x128xf32, #tpu.memory_space<vmem>>, vector<1x8x128xf32>
    %567 = vector.shape_cast %566 : vector<1x8x128xf32> to vector<8x128xf32>
    %568 = arith.subf %567, %515 : vector<8x128xf32>
    %569 = math.exp %568 : vector<8x128xf32>
    %570 = arith.addf %564, %569 : vector<8x128xf32>
    %c9_176 = arith.constant 9 : index
    %571 = arith.index_cast %2 : i32 to index
    %c0_177 = arith.constant 0 : index
    %572 = vector.load %arg1[%c9_176, %571, %c0_177] : memref<30x8x128xf32, #tpu.memory_space<vmem>>, vector<1x8x128xf32>
    %573 = vector.shape_cast %572 : vector<1x8x128xf32> to vector<8x128xf32>
    %574 = arith.subf %573, %515 : vector<8x128xf32>
    %575 = math.exp %574 : vector<8x128xf32>
    %576 = arith.addf %570, %575 : vector<8x128xf32>
    %c10_178 = arith.constant 10 : index
    %577 = arith.index_cast %2 : i32 to index
    %c0_179 = arith.constant 0 : index
    %578 = vector.load %arg1[%c10_178, %577, %c0_179] : memref<30x8x128xf32, #tpu.memory_space<vmem>>, vector<1x8x128xf32>
    %579 = vector.shape_cast %578 : vector<1x8x128xf32> to vector<8x128xf32>
    %580 = arith.subf %579, %515 : vector<8x128xf32>
    %581 = math.exp %580 : vector<8x128xf32>
    %582 = arith.addf %576, %581 : vector<8x128xf32>
    %c11_180 = arith.constant 11 : index
    %583 = arith.index_cast %2 : i32 to index
    %c0_181 = arith.constant 0 : index
    %584 = vector.load %arg1[%c11_180, %583, %c0_181] : memref<30x8x128xf32, #tpu.memory_space<vmem>>, vector<1x8x128xf32>
    %585 = vector.shape_cast %584 : vector<1x8x128xf32> to vector<8x128xf32>
    %586 = arith.subf %585, %515 : vector<8x128xf32>
    %587 = math.exp %586 : vector<8x128xf32>
    %588 = arith.addf %582, %587 : vector<8x128xf32>
    %c12_182 = arith.constant 12 : index
    %589 = arith.index_cast %2 : i32 to index
    %c0_183 = arith.constant 0 : index
    %590 = vector.load %arg1[%c12_182, %589, %c0_183] : memref<30x8x128xf32, #tpu.memory_space<vmem>>, vector<1x8x128xf32>
    %591 = vector.shape_cast %590 : vector<1x8x128xf32> to vector<8x128xf32>
    %592 = arith.subf %591, %515 : vector<8x128xf32>
    %593 = math.exp %592 : vector<8x128xf32>
    %594 = arith.addf %588, %593 : vector<8x128xf32>
    %c13_184 = arith.constant 13 : index
    %595 = arith.index_cast %2 : i32 to index
    %c0_185 = arith.constant 0 : index
    %596 = vector.load %arg1[%c13_184, %595, %c0_185] : memref<30x8x128xf32, #tpu.memory_space<vmem>>, vector<1x8x128xf32>
    %597 = vector.shape_cast %596 : vector<1x8x128xf32> to vector<8x128xf32>
    %598 = arith.subf %597, %515 : vector<8x128xf32>
    %599 = math.exp %598 : vector<8x128xf32>
    %600 = arith.addf %594, %599 : vector<8x128xf32>
    %c14_186 = arith.constant 14 : index
    %601 = arith.index_cast %2 : i32 to index
    %c0_187 = arith.constant 0 : index
    %602 = vector.load %arg1[%c14_186, %601, %c0_187] : memref<30x8x128xf32, #tpu.memory_space<vmem>>, vector<1x8x128xf32>
    %603 = vector.shape_cast %602 : vector<1x8x128xf32> to vector<8x128xf32>
    %604 = arith.subf %603, %515 : vector<8x128xf32>
    %605 = math.exp %604 : vector<8x128xf32>
    %606 = arith.addf %600, %605 : vector<8x128xf32>
    %c15_188 = arith.constant 15 : index
    %607 = arith.index_cast %2 : i32 to index
    %c0_189 = arith.constant 0 : index
    %608 = vector.load %arg1[%c15_188, %607, %c0_189] : memref<30x8x128xf32, #tpu.memory_space<vmem>>, vector<1x8x128xf32>
    %609 = vector.shape_cast %608 : vector<1x8x128xf32> to vector<8x128xf32>
    %610 = arith.subf %609, %515 : vector<8x128xf32>
    %611 = math.exp %610 : vector<8x128xf32>
    %612 = arith.addf %606, %611 : vector<8x128xf32>
    %c16_190 = arith.constant 16 : index
    %613 = arith.index_cast %2 : i32 to index
    %c0_191 = arith.constant 0 : index
    %614 = vector.load %arg1[%c16_190, %613, %c0_191] : memref<30x8x128xf32, #tpu.memory_space<vmem>>, vector<1x8x128xf32>
    %615 = vector.shape_cast %614 : vector<1x8x128xf32> to vector<8x128xf32>
    %616 = arith.subf %615, %515 : vector<8x128xf32>
    %617 = math.exp %616 : vector<8x128xf32>
    %618 = arith.addf %612, %617 : vector<8x128xf32>
    %c17_192 = arith.constant 17 : index
    %619 = arith.index_cast %2 : i32 to index
    %c0_193 = arith.constant 0 : index
    %620 = vector.load %arg1[%c17_192, %619, %c0_193] : memref<30x8x128xf32, #tpu.memory_space<vmem>>, vector<1x8x128xf32>
    %621 = vector.shape_cast %620 : vector<1x8x128xf32> to vector<8x128xf32>
    %622 = arith.subf %621, %515 : vector<8x128xf32>
    %623 = math.exp %622 : vector<8x128xf32>
    %624 = arith.addf %618, %623 : vector<8x128xf32>
    %c18_194 = arith.constant 18 : index
    %625 = arith.index_cast %2 : i32 to index
    %c0_195 = arith.constant 0 : index
    %626 = vector.load %arg1[%c18_194, %625, %c0_195] : memref<30x8x128xf32, #tpu.memory_space<vmem>>, vector<1x8x128xf32>
    %627 = vector.shape_cast %626 : vector<1x8x128xf32> to vector<8x128xf32>
    %628 = arith.subf %627, %515 : vector<8x128xf32>
    %629 = math.exp %628 : vector<8x128xf32>
    %630 = arith.addf %624, %629 : vector<8x128xf32>
    %c19_196 = arith.constant 19 : index
    %631 = arith.index_cast %2 : i32 to index
    %c0_197 = arith.constant 0 : index
    %632 = vector.load %arg1[%c19_196, %631, %c0_197] : memref<30x8x128xf32, #tpu.memory_space<vmem>>, vector<1x8x128xf32>
    %633 = vector.shape_cast %632 : vector<1x8x128xf32> to vector<8x128xf32>
    %634 = arith.subf %633, %515 : vector<8x128xf32>
    %635 = math.exp %634 : vector<8x128xf32>
    %636 = arith.addf %630, %635 : vector<8x128xf32>
    %637 = math.log %636 : vector<8x128xf32>
    %638 = arith.addf %515, %637 : vector<8x128xf32>
    %639 = arith.subf %638, %514 : vector<8x128xf32>
    %640 = arith.mulf %203, %639 : vector<8x128xf32>
    %641 = arith.addf %320, %640 : vector<8x128xf32>
    %642 = arith.addf %0, %641 : vector<8x128xf32>
    %c1_i32 = arith.constant 1 : i32
    %c0_198 = arith.constant 0 : index
    %c0_199 = arith.constant 0 : index
    %c0_200 = arith.constant 0 : index
    %643 = vector.load %arg3[%c0_198, %c0_199, %c0_200] : memref<1x8x128xf32, #tpu.memory_space<vmem>>, vector<1x8x128xf32>
    %644 = vector.shape_cast %643 : vector<1x8x128xf32> to vector<8x128xf32>
    %645 = vector.shape_cast %642 : vector<8x128xf32> to vector<1x8x128xf32>
    tpu.vector_store %arg3[%c0_198, %c0_199, %c0_200], %645 {strides = array<i32>} : memref<1x8x128xf32, #tpu.memory_space<vmem>>, vector<1x8x128xf32>,
    return
  }
  func.func @transform_0(%arg0: i32) -> (i32, i32, i32) {
    %c0_i32 = arith.constant 0 : i32
    %c0_i32_0 = arith.constant 0 : i32
    %c0_i32_1 = arith.constant 0 : i32
    return %c0_i32, %arg0, %c0_i32_0 : i32, i32, i32
  }
  func.func @transform_1(%arg0: i32) -> (i32, i32, i32) {
    %c0_i32 = arith.constant 0 : i32
    %c0_i32_0 = arith.constant 0 : i32
    %c0_i32_1 = arith.constant 0 : i32
    return %c0_i32, %arg0, %c0_i32_0 : i32, i32, i32
  }
  func.func @transform_2(%arg0: i32) -> (i32, i32, i32) {
    %c0_i32 = arith.constant 0 : i32
    %c0_i32_0 = arith.constant 0 : i32
    %c0_i32_1 = arith.constant 0 : i32
    return %arg0, %c0_i32, %c0_i32_0 : i32, i32, i32
  }
}

</mosaic_0001>

<llo_original>
// kernel: tpu_custom_call.1
$region0: #{tpu_custom_call.1}
  #allocation0 [shape = 'u32[]', space=smem, size = 0x4, offset = 0x4, fixed_abs, tag = 'smem constant byte address 0x4 - core index']
  #allocation1 [shape = 'u32[72,128]{1,0:T(1,128)}', space=vmem, size = 0x9000, scoped, tag = 'internal scratch']
  %s0 = inlined_call_operand.hbm [shape: f32[30,8,128], index: 0, kind: input, shape index: {}]
  %s1 = inlined_call_operand.hbm [shape: f32[30,8,128], index: 1, kind: input, shape index: {}]
  %s2 = inlined_call_operand.hbm [shape: f32[1,8,128], index: 2, kind: output, shape index: {}]
  %s3 = sld [smem:[#allocation0]]
  $region26: #{tpu_custom_call.1} parent=0
    _
  %s5 = ssub.s32 1, %s3
  %s6 = scalar_select 0, %s5, %s3
  $region1: #{tpu_custom_call.1} parent=0
    #allocation2 [shape = 'u8[122880]{0}', space=vmem, size = 0x1e000, scoped, tag = 'input window, operand 0, single buffered']
    #allocation3 [shape = 's32[1]{0}', space=sflag, size = 0x4, scoped, tag = 'scoped memory for tpu_custom_call.1']
    #allocation4 [shape = 's32[1]{0}', space=sflag, size = 0x4, scoped, tag = 'scoped memory for tpu_custom_call.1']
    #allocation5 [shape = 'u8[122880]{0}', space=vmem, size = 0x1e000, scoped, tag = 'input window, operand 1, single buffered']
    #allocation6 [shape = 's32[1]{0}', space=sflag, size = 0x4, scoped, tag = 'scoped memory for tpu_custom_call.1']
    #allocation7 [shape = 'u8[4096]{0}', space=vmem, size = 0x1000, scoped, tag = 'output window, operand 0, single buffered']
    %7 = vsyncpa [#allocation3], 0
    %8 = vsyncpa [#allocation6], 0
    %9 = vsyncpa [#allocation4], 0
    // Predicated region
    $region2: #{tpu_custom_call.1} parent=1 // pred_check
      _
    $region3: #{tpu_custom_call.1} parent=1 // pred_check_branch
      %11 = sbr.rel (0) target = $region5
    $region4: #{tpu_custom_call.1} parent=1 // pred_region
      %13 = vsyncadd [#allocation3], 0
      %s14 = sshll.u32 %s0, 4
      %s15 = int_to_ptr.hbm [resolvable:$true] %s14
      %s16 = sshll.u32 [#allocation2], 4
      %s17 = int_to_ptr.vmem [resolvable:$true] %s16
      %22 = dma.hbm_to_vmem [thread:$0]  %s15, 3840, %s17, [#allocation3], 128, 128, 8
    $region5: #{tpu_custom_call.1} parent=1 // pred_fallthru
      _
    // Predicated region
    $region6: #{tpu_custom_call.1} parent=1 // pred_check
      _
    $region7: #{tpu_custom_call.1} parent=1 // pred_check_branch
      %24 = sbr.rel (0) target = $region9
    $region8: #{tpu_custom_call.1} parent=1 // pred_region
      %26 = vsyncadd [#allocation6], 0
      %s27 = sshll.u32 %s1, 4
      %s28 = int_to_ptr.hbm [resolvable:$true] %s27
      %s29 = sshll.u32 [#allocation5], 4
      %s30 = int_to_ptr.vmem [resolvable:$true] %s29
      %35 = dma.hbm_to_vmem [thread:$0]  %s28, 3840, %s30, [#allocation6], 128, 128, 8
    $region9: #{tpu_custom_call.1} parent=1 // pred_fallthru
      _
    // Predicated region
    $region10: #{tpu_custom_call.1} parent=1 // pred_check
      _
    $region11: #{tpu_custom_call.1} parent=1 // pred_check_branch
      %37 = sbr.rel (0) target = $region13
    $region12: #{tpu_custom_call.1} parent=1 // pred_region
      %39 = dma.done [#allocation3], 3840
    $region13: #{tpu_custom_call.1} parent=1 // pred_fallthru
      _
    // Predicated region
    $region14: #{tpu_custom_call.1} parent=1 // pred_check
      _
    $region15: #{tpu_custom_call.1} parent=1 // pred_check_branch
      %41 = sbr.rel (0) target = $region17
    $region16: #{tpu_custom_call.1} parent=1 // pred_region
      %43 = dma.done [#allocation6], 3840
    $region17: #{tpu_custom_call.1} parent=1 // pred_fallthru
      _
    %s44 = sadd.s32 0, 160
    %s45 = scalar_lea.vmem [#allocation2], %s44
    %v46 = vld [vmem:[%s45] sm:$0xff]
    %s47 = sadd.s32 0, 200
    %s48 = scalar_lea.vmem [#allocation2], %s47
    %v49 = vld [vmem:[%s48] sm:$0xff]
    %s50 = sadd.s32 0, 168
    %s51 = scalar_lea.vmem [#allocation2], %s50
    %v52 = vld [vmem:[%s51] sm:$0xff]
    %s53 = sadd.s32 0, 208
    %s54 = scalar_lea.vmem [#allocation2], %s53
    %v55 = vld [vmem:[%s54] sm:$0xff]
    %s56 = sadd.s32 0, 176
    %s57 = scalar_lea.vmem [#allocation2], %s56
    %v58 = vld [vmem:[%s57] sm:$0xff]
    %s59 = sadd.s32 0, 216
    %s60 = scalar_lea.vmem [#allocation2], %s59
    %v61 = vld [vmem:[%s60] sm:$0xff]
    %s62 = sadd.s32 0, 184
    %s63 = scalar_lea.vmem [#allocation2], %s62
    %v64 = vld [vmem:[%s63] sm:$0xff]
    %s65 = sadd.s32 0, 224
    %s66 = scalar_lea.vmem [#allocation2], %s65
    %v67 = vld [vmem:[%s66] sm:$0xff]
    %s68 = sadd.s32 0, 192
    %s69 = scalar_lea.vmem [#allocation2], %s68
    %v70 = vld [vmem:[%s69] sm:$0xff]
    %s71 = sadd.s32 0, 232
    %s72 = scalar_lea.vmem [#allocation2], %s71
    %v73 = vld [vmem:[%s72] sm:$0xff]
    %s74 = scalar_lea.vmem [#allocation5], %s44
    %v75 = vld [vmem:[%s74] sm:$0xff]
    %s76 = scalar_lea.vmem [#allocation5], %s47
    %v77 = vld [vmem:[%s76] sm:$0xff]
    %s78 = scalar_lea.vmem [#allocation5], %s50
    %v79 = vld [vmem:[%s78] sm:$0xff]
    %s80 = scalar_lea.vmem [#allocation5], %s53
    %v81 = vld [vmem:[%s80] sm:$0xff]
    %s82 = scalar_lea.vmem [#allocation5], %s56
    %v83 = vld [vmem:[%s82] sm:$0xff]
    %s84 = scalar_lea.vmem [#allocation5], %s59
    %v85 = vld [vmem:[%s84] sm:$0xff]
    %s86 = scalar_lea.vmem [#allocation5], %s62
    %v87 = vld [vmem:[%s86] sm:$0xff]
    %s88 = scalar_lea.vmem [#allocation5], %s65
    %v89 = vld [vmem:[%s88] sm:$0xff]
    %s90 = scalar_lea.vmem [#allocation5], %s68
    %v91 = vld [vmem:[%s90] sm:$0xff]
    %v92 = vmul.f32 %v83, 0.5
    %v93 = vsub.f32 %v75, %v92
    %v94 = vmul.f32 %v85, 0.5
    %v95 = vsub.f32 %v77, %v94
    %v96 = vadd.f32 %v75, %v92
    %v97 = vadd.f32 %v77, %v94
    %v98 = vmul.f32 %v87, 0.5
    %v99 = vsub.f32 %v79, %v98
    %v100 = vmul.f32 %v89, 0.5
    %v101 = vsub.f32 %v81, %v100
    %v102 = vadd.f32 %v79, %v98
    %v103 = vadd.f32 %v81, %v100
    %v104 = vmul.f32 %v83, %v87
    %v105 = vmul.f32 %v85, %v89
    %v106 = vmul.f32 %v58, 0.5
    %v107 = vsub.f32 %v46, %v106
    %v108 = vadd.f32 %v46, %v106
    %v109 = vmul.f32 %v64, 0.5
    %v110 = vsub.f32 %v52, %v109
    %v111 = vadd.f32 %v52, %v109
    %v112 = vmul.f32 %v58, %v64
    %v113 = vmin.f32 %v108, %v96
    %v114 = vmax.f32 %v107, %v93
    %v115 = vsub.f32 %v113, %v114
    %v116 = vmax.f32 %v115, 0.0
    %v117 = vmin.f32 %v111, %v102
    %v118 = vmax.f32 %v110, %v99
    %v119 = vsub.f32 %v117, %v118
    %v120 = vmax.f32 %v119, 0.0
    %v121 = vmul.f32 %v116, %v120
    %v122 = vadd.f32 %v112, %v104
    %v123 = vsub.f32 %v122, %v121
    %vm124 = vcmp.eq.f32.partialorder %v123, 0.0
    %v125 = vsel %vm124, 0.0, %v121
    %v126 = vsel %vm124, 1e-06, %v123
    %v127 = vrcp.pop %v126
    %v128 = vmul.f32 %v125, %v127
    %v129 = vmin.f32 %v108, %v97
    %v130 = vmax.f32 %v107, %v95
    %v131 = vsub.f32 %v129, %v130
    %v132 = vmax.f32 %v131, 0.0
    %v133 = vmin.f32 %v111, %v103
    %v134 = vmax.f32 %v110, %v101
    %v135 = vsub.f32 %v133, %v134
    %v136 = vmax.f32 %v135, 0.0
    %v137 = vmul.f32 %v132, %v136
    %v138 = vadd.f32 %v112, %v105
    %v139 = vsub.f32 %v138, %v137
    %vm140 = vcmp.eq.f32.partialorder %v139, 0.0
    %v141 = vsel %vm140, 0.0, %v137
    %v142 = vsel %vm140, 1e-06, %v139
    %v143 = vrcp.pop %v142
    %v144 = vmul.f32 %v141, %v143
    %v145 = vmax.f32 %v128, %v144
    %v146 = vmul.f32 %v61, 0.5
    %v147 = vsub.f32 %v49, %v146
    %v148 = vadd.f32 %v49, %v146
    %v149 = vmul.f32 %v67, 0.5
    %v150 = vsub.f32 %v55, %v149
    %v151 = vadd.f32 %v55, %v149
    %v152 = vmul.f32 %v61, %v67
    %v153 = vmin.f32 %v148, %v96
    %v154 = vmax.f32 %v147, %v93
    %v155 = vsub.f32 %v153, %v154
    %v156 = vmax.f32 %v155, 0.0
    %v157 = vmin.f32 %v151, %v102
    %v158 = vmax.f32 %v150, %v99
    %v159 = vsub.f32 %v157, %v158
    %v160 = vmax.f32 %v159, 0.0
    %v161 = vmul.f32 %v156, %v160
    %v162 = vadd.f32 %v152, %v104
    %v163 = vsub.f32 %v162, %v161
    %vm164 = vcmp.eq.f32.partialorder %v163, 0.0
    %v165 = vsel %vm164, 0.0, %v161
    %v166 = vsel %vm164, 1e-06, %v163
    %v167 = vrcp.pop %v166
    %v168 = vmul.f32 %v165, %v167
    %v169 = vmin.f32 %v148, %v97
    %v170 = vmax.f32 %v147, %v95
    %v171 = vsub.f32 %v169, %v170
    %v172 = vmax.f32 %v171, 0.0
    %v173 = vmin.f32 %v151, %v103
    %v174 = vmax.f32 %v150, %v101
    %v175 = vsub.f32 %v173, %v174
    %v176 = vmax.f32 %v175, 0.0
    %v177 = vmul.f32 %v172, %v176
    %v178 = vadd.f32 %v152, %v105
    %v179 = vsub.f32 %v178, %v177
    %vm180 = vcmp.eq.f32.partialorder %v179, 0.0
    %v181 = vsel %vm180, 0.0, %v177
    %v182 = vsel %vm180, 1e-06, %v179
    %v183 = vrcp.pop %v182
    %v184 = vmul.f32 %v181, %v183
    %v185 = vmax.f32 %v168, %v184
    %vm186 = vcmp.ge.f32.partialorder %v145, %v185
    %vm187 = vmxor %vm186, 1
    %vm188 = vcmp.gt.f32.partialorder %v91, 0.0
    %v189 = vsel %vm188, 1, 0
    %v190 = vcvt.s32.f32 %v189
    %vm191 = vmand %vm188, %vm186
    %v192 = vsel %vm191, 1, 0
    %v193 = vcvt.s32.f32 %v192
    %v194 = vsub.f32 1.0, %v193
    %v195 = vsub.f32 %v46, %v75
    %v196 = vmul.f32 %v195, %v195
    %v197 = vsub.f32 %v52, %v79
    %v198 = vmul.f32 %v197, %v197
    %v199 = vadd.f32 %v196, %v198
    %vm200 = vcmp.gt.f32.partialorder %v58, 0.0
    %vm201 = vcmp.lt.f32.partialorder %v58, 0.0
    %v202 = vsel %vm201, -1.0, 0.0
    %v203 = vsel %vm200, 1.0, %v202
    %v204 = vand.u32 2147483647, %v58
    %v205 = vadd.f32 %v204, 1e-06
    %v206 = vrsqrt.pop %v205
    %v207 = vmul.f32 %v206, %v205
    %v208 = vmul.f32 %v207, %v206
    %v209 = vmul.f32 0.5, %v208
    %v210 = vsub.f32 1.5, %v209
    %v211 = vmul.f32 %v206, %v210
    %v212 = vmul.f32 %v205, %v211
    %vm213 = vcmp.eq.f32.partialorder %v205, inf
    %v214 = vsel %vm213, %v205, %v212
    %vm215 = vcmp.eq.f32.partialorder %v205, 0.0
    %v216 = vand.u32 %v205, 2147483648
    %v217 = vsel %vm215, %v216, %v214
    %v218 = vmul.f32 %v203, %v217
    %vm219 = vcmp.gt.f32.partialorder %v64, 0.0
    %vm220 = vcmp.lt.f32.partialorder %v64, 0.0
    %v221 = vsel %vm220, -1.0, 0.0
    %v222 = vsel %vm219, 1.0, %v221
    %v223 = vand.u32 2147483647, %v64
    %v224 = vadd.f32 %v223, 1e-06
    %v225 = vrsqrt.pop %v224
    %v226 = vmul.f32 %v225, %v224
    %v227 = vmul.f32 %v226, %v225
    %v228 = vmul.f32 0.5, %v227
    %v229 = vsub.f32 1.5, %v228
    %v230 = vmul.f32 %v225, %v229
    %v231 = vmul.f32 %v224, %v230
    %vm232 = vcmp.eq.f32.partialorder %v224, inf
    %v233 = vsel %vm232, %v224, %v231
    %vm234 = vcmp.eq.f32.partialorder %v224, 0.0
    %v235 = vand.u32 %v224, 2147483648
    %v236 = vsel %vm234, %v235, %v233
    %v237 = vmul.f32 %v222, %v236
    %v238 = vrsqrt.pop %v83
    %v239 = vmul.f32 %v238, %v83
    %v240 = vmul.f32 %v239, %v238
    %v241 = vmul.f32 0.5, %v240
    %v242 = vsub.f32 1.5, %v241
    %v243 = vmul.f32 %v238, %v242
    %v244 = vmul.f32 %v83, %v243
    %vm245 = vcmp.eq.f32.partialorder %v83, inf
    %v246 = vsel %vm245, %v83, %v244
    %vm247 = vcmp.eq.f32.partialorder %v83, 0.0
    %v248 = vand.u32 %v83, 2147483648
    %v249 = vsel %vm247, %v248, %v246
    %v250 = vsub.f32 %v218, %v249
    %v251 = vmul.f32 %v250, %v250
    %v252 = vrsqrt.pop %v87
    %v253 = vmul.f32 %v252, %v87
    %v254 = vmul.f32 %v253, %v252
    %v255 = vmul.f32 0.5, %v254
    %v256 = vsub.f32 1.5, %v255
    %v257 = vmul.f32 %v252, %v256
    %v258 = vmul.f32 %v87, %v257
    %vm259 = vcmp.eq.f32.partialorder %v87, inf
    %v260 = vsel %vm259, %v87, %v258
    %vm261 = vcmp.eq.f32.partialorder %v87, 0.0
    %v262 = vand.u32 %v87, 2147483648
    %v263 = vsel %vm261, %v262, %v260
    %v264 = vsub.f32 %v237, %v263
    %v265 = vmul.f32 %v264, %v264
    %v266 = vadd.f32 %v251, %v265
    %v267 = vsub.f32 %v70, %v145
    %v268 = vmul.f32 %v267, %v267
    %v269 = vmul.f32 %v70, %v70
    %v270 = vadd.f32 %v199, %v266
    %v271 = vmul.f32 %v270, 5.0
    %v272 = vadd.f32 %v271, %v268
    %v273 = vmul.f32 %v193, %v272
    %v274 = vadd.f32 %v273, 0.0
    %v275 = vmul.f32 %v194, 0.5
    %v276 = vmul.f32 %v275, %v269
    %v277 = vadd.f32 %v274, %v276
    %vm278 = vmand %vm188, %vm187
    %v279 = vsel %vm278, 1, 0
    %v280 = vcvt.s32.f32 %v279
    %v281 = vsub.f32 1.0, %v280
    %v282 = vsub.f32 %v49, %v77
    %v283 = vmul.f32 %v282, %v282
    %v284 = vsub.f32 %v55, %v81
    %v285 = vmul.f32 %v284, %v284
    %v286 = vadd.f32 %v283, %v285
    %vm287 = vcmp.gt.f32.partialorder %v61, 0.0
    %vm288 = vcmp.lt.f32.partialorder %v61, 0.0
    %v289 = vsel %vm288, -1.0, 0.0
    %v290 = vsel %vm287, 1.0, %v289
    %v291 = vand.u32 2147483647, %v61
    %v292 = vadd.f32 %v291, 1e-06
    %v293 = vrsqrt.pop %v292
    %v294 = vmul.f32 %v293, %v292
    %v295 = vmul.f32 %v294, %v293
    %v296 = vmul.f32 0.5, %v295
    %v297 = vsub.f32 1.5, %v296
    %v298 = vmul.f32 %v293, %v297
    %v299 = vmul.f32 %v292, %v298
    %vm300 = vcmp.eq.f32.partialorder %v292, inf
    %v301 = vsel %vm300, %v292, %v299
    %vm302 = vcmp.eq.f32.partialorder %v292, 0.0
    %v303 = vand.u32 %v292, 2147483648
    %v304 = vsel %vm302, %v303, %v301
    %v305 = vmul.f32 %v290, %v304
    %vm306 = vcmp.gt.f32.partialorder %v67, 0.0
    %vm307 = vcmp.lt.f32.partialorder %v67, 0.0
    %v308 = vsel %vm307, -1.0, 0.0
    %v309 = vsel %vm306, 1.0, %v308
    %v310 = vand.u32 2147483647, %v67
    %v311 = vadd.f32 %v310, 1e-06
    %v312 = vrsqrt.pop %v311
    %v313 = vmul.f32 %v312, %v311
    %v314 = vmul.f32 %v313, %v312
    %v315 = vmul.f32 0.5, %v314
    %v316 = vsub.f32 1.5, %v315
    %v317 = vmul.f32 %v312, %v316
    %v318 = vmul.f32 %v311, %v317
    %vm319 = vcmp.eq.f32.partialorder %v311, inf
    %v320 = vsel %vm319, %v311, %v318
    %vm321 = vcmp.eq.f32.partialorder %v311, 0.0
    %v322 = vand.u32 %v311, 2147483648
    %v323 = vsel %vm321, %v322, %v320
    %v324 = vmul.f32 %v309, %v323
    %v325 = vrsqrt.pop %v85
    %v326 = vmul.f32 %v325, %v85
    %v327 = vmul.f32 %v326, %v325
    %v328 = vmul.f32 0.5, %v327
    %v329 = vsub.f32 1.5, %v328
    %v330 = vmul.f32 %v325, %v329
    %v331 = vmul.f32 %v85, %v330
    %vm332 = vcmp.eq.f32.partialorder %v85, inf
    %v333 = vsel %vm332, %v85, %v331
    %vm334 = vcmp.eq.f32.partialorder %v85, 0.0
    %v335 = vand.u32 %v85, 2147483648
    %v336 = vsel %vm334, %v335, %v333
    %v337 = vsub.f32 %v305, %v336
    %v338 = vmul.f32 %v337, %v337
    %v339 = vrsqrt.pop %v89
    %v340 = vmul.f32 %v339, %v89
    %v341 = vmul.f32 %v340, %v339
    %v342 = vmul.f32 0.5, %v341
    %v343 = vsub.f32 1.5, %v342
    %v344 = vmul.f32 %v339, %v343
    %v345 = vmul.f32 %v89, %v344
    %vm346 = vcmp.eq.f32.partialorder %v89, inf
    %v347 = vsel %vm346, %v89, %v345
    %vm348 = vcmp.eq.f32.partialorder %v89, 0.0
    %v349 = vand.u32 %v89, 2147483648
    %v350 = vsel %vm348, %v349, %v347
    %v351 = vsub.f32 %v324, %v350
    %v352 = vmul.f32 %v351, %v351
    %v353 = vadd.f32 %v338, %v352
    %v354 = vsub.f32 %v73, %v185
    %v355 = vmul.f32 %v354, %v354
    %v356 = vmul.f32 %v73, %v73
    %v357 = vadd.f32 %v286, %v353
    %v358 = vmul.f32 %v357, 5.0
    %v359 = vadd.f32 %v358, %v355
    %v360 = vmul.f32 %v280, %v359
    %v361 = vadd.f32 %v277, %v360
    %v362 = vmul.f32 %v281, 0.5
    %v363 = vmul.f32 %v362, %v356
    %v364 = vadd.f32 %v361, %v363
    %v365 = vld [vmem:[#allocation2] sm:$0xff]
    %v366 = vld [vmem:[#allocation5] sm:$0xff]
    %s367 = sadd.s32 0, 8
    %s368 = scalar_lea.vmem [#allocation5], %s367
    %v369 = vld [vmem:[%s368] sm:$0xff]
    %s370 = scalar_lea.vmem [#allocation2], %s367
    %v371 = vld [vmem:[%s370] sm:$0xff]
    %vm372 = vcmp.gt.f32.partialorder %v369, %v366
    %v373 = vsel %vm372, %v369, %v366
    %v374 = vsel %vm372, %v371, %v365
    %v375 = vmax.f32 %v365, %v371
    %s376 = sadd.s32 0, 16
    %s377 = scalar_lea.vmem [#allocation5], %s376
    %v378 = vld [vmem:[%s377] sm:$0xff]
    %s379 = scalar_lea.vmem [#allocation2], %s376
    %v380 = vld [vmem:[%s379] sm:$0xff]
    %vm381 = vcmp.gt.f32.partialorder %v378, %v373
    %v382 = vsel %vm381, %v378, %v373
    %v383 = vsel %vm381, %v380, %v374
    %v384 = vmax.f32 %v375, %v380
    %s385 = sadd.s32 0, 24
    %s386 = scalar_lea.vmem [#allocation5], %s385
    %v387 = vld [vmem:[%s386] sm:$0xff]
    %s388 = scalar_lea.vmem [#allocation2], %s385
    %v389 = vld [vmem:[%s388] sm:$0xff]
    %vm390 = vcmp.gt.f32.partialorder %v387, %v382
    %v391 = vsel %vm390, %v387, %v382
    %v392 = vsel %vm390, %v389, %v383
    %v393 = vmax.f32 %v384, %v389
    %s394 = sadd.s32 0, 32
    %s395 = scalar_lea.vmem [#allocation5], %s394
    %v396 = vld [vmem:[%s395] sm:$0xff]
    %s397 = scalar_lea.vmem [#allocation2], %s394
    %v398 = vld [vmem:[%s397] sm:$0xff]
    %vm399 = vcmp.gt.f32.partialorder %v396, %v391
    %v400 = vsel %vm399, %v396, %v391
    %v401 = vsel %vm399, %v398, %v392
    %v402 = vmax.f32 %v393, %v398
    %s403 = sadd.s32 0, 40
    %s404 = scalar_lea.vmem [#allocation5], %s403
    %v405 = vld [vmem:[%s404] sm:$0xff]
    %s406 = scalar_lea.vmem [#allocation2], %s403
    %v407 = vld [vmem:[%s406] sm:$0xff]
    %vm408 = vcmp.gt.f32.partialorder %v405, %v400
    %v409 = vsel %vm408, %v405, %v400
    %v410 = vsel %vm408, %v407, %v401
    %v411 = vmax.f32 %v402, %v407
    %s412 = sadd.s32 0, 48
    %s413 = scalar_lea.vmem [#allocation5], %s412
    %v414 = vld [vmem:[%s413] sm:$0xff]
    %s415 = scalar_lea.vmem [#allocation2], %s412
    %v416 = vld [vmem:[%s415] sm:$0xff]
    %vm417 = vcmp.gt.f32.partialorder %v414, %v409
    %v418 = vsel %vm417, %v414, %v409
    %v419 = vsel %vm417, %v416, %v410
    %v420 = vmax.f32 %v411, %v416
    %s421 = sadd.s32 0, 56
    %s422 = scalar_lea.vmem [#allocation5], %s421
    %v423 = vld [vmem:[%s422] sm:$0xff]
    %s424 = scalar_lea.vmem [#allocation2], %s421
    %v425 = vld [vmem:[%s424] sm:$0xff]
    %vm426 = vcmp.gt.f32.partialorder %v423, %v418
    %v427 = vsel %vm426, %v423, %v418
    %v428 = vsel %vm426, %v425, %v419
    %v429 = vmax.f32 %v420, %v425
    %s430 = sadd.s32 0, 64
    %s431 = scalar_lea.vmem [#allocation5], %s430
    %v432 = vld [vmem:[%s431] sm:$0xff]
    %s433 = scalar_lea.vmem [#allocation2], %s430
    %v434 = vld [vmem:[%s433] sm:$0xff]
    %vm435 = vcmp.gt.f32.partialorder %v432, %v427
    %v436 = vsel %vm435, %v432, %v427
    %v437 = vsel %vm435, %v434, %v428
    %v438 = vmax.f32 %v429, %v434
    %s439 = sadd.s32 0, 72
    %s440 = scalar_lea.vmem [#allocation5], %s439
    %v441 = vld [vmem:[%s440] sm:$0xff]
    %s442 = scalar_lea.vmem [#allocation2], %s439
    %v443 = vld [vmem:[%s442] sm:$0xff]
    %vm444 = vcmp.gt.f32.partialorder %v441, %v436
    %v445 = vsel %vm444, %v441, %v436
    %v446 = vsel %vm444, %v443, %v437
    %v447 = vmax.f32 %v438, %v443
    %s448 = sadd.s32 0, 80
    %s449 = scalar_lea.vmem [#allocation5], %s448
    %v450 = vld [vmem:[%s449] sm:$0xff]
    %s451 = scalar_lea.vmem [#allocation2], %s448
    %v452 = vld [vmem:[%s451] sm:$0xff]
    %vm453 = vcmp.gt.f32.partialorder %v450, %v445
    %v454 = vsel %vm453, %v450, %v445
    %v455 = vsel %vm453, %v452, %v446
    %v456 = vmax.f32 %v447, %v452
    %s457 = sadd.s32 0, 88
    %s458 = scalar_lea.vmem [#allocation5], %s457
    %v459 = vld [vmem:[%s458] sm:$0xff]
    %s460 = scalar_lea.vmem [#allocation2], %s457
    %v461 = vld [vmem:[%s460] sm:$0xff]
    %vm462 = vcmp.gt.f32.partialorder %v459, %v454
    %v463 = vsel %vm462, %v459, %v454
    %v464 = vsel %vm462, %v461, %v455
    %v465 = vmax.f32 %v456, %v461
    %s466 = sadd.s32 0, 96
    %s467 = scalar_lea.vmem [#allocation5], %s466
    %v468 = vld [vmem:[%s467] sm:$0xff]
    %s469 = scalar_lea.vmem [#allocation2], %s466
    %v470 = vld [vmem:[%s469] sm:$0xff]
    %vm471 = vcmp.gt.f32.partialorder %v468, %v463
    %v472 = vsel %vm471, %v468, %v463
    %v473 = vsel %vm471, %v470, %v464
    %v474 = vmax.f32 %v465, %v470
    %s475 = sadd.s32 0, 104
    %s476 = scalar_lea.vmem [#allocation5], %s475
    %v477 = vld [vmem:[%s476] sm:$0xff]
    %s478 = scalar_lea.vmem [#allocation2], %s475
    %v479 = vld [vmem:[%s478] sm:$0xff]
    %vm480 = vcmp.gt.f32.partialorder %v477, %v472
    %v481 = vsel %vm480, %v477, %v472
    %v482 = vsel %vm480, %v479, %v473
    %v483 = vmax.f32 %v474, %v479
    %s484 = sadd.s32 0, 112
    %s485 = scalar_lea.vmem [#allocation5], %s484
    %v486 = vld [vmem:[%s485] sm:$0xff]
    %s487 = scalar_lea.vmem [#allocation2], %s484
    %v488 = vld [vmem:[%s487] sm:$0xff]
    %vm489 = vcmp.gt.f32.partialorder %v486, %v481
    %v490 = vsel %vm489, %v486, %v481
    %v491 = vsel %vm489, %v488, %v482
    %v492 = vmax.f32 %v483, %v488
    %s493 = sadd.s32 0, 120
    %s494 = scalar_lea.vmem [#allocation5], %s493
    %v495 = vld [vmem:[%s494] sm:$0xff]
    %s496 = scalar_lea.vmem [#allocation2], %s493
    %v497 = vld [vmem:[%s496] sm:$0xff]
    %vm498 = vcmp.gt.f32.partialorder %v495, %v490
    %v499 = vsel %vm498, %v495, %v490
    %v500 = vsel %vm498, %v497, %v491
    %v501 = vmax.f32 %v492, %v497
    %s502 = sadd.s32 0, 128
    %s503 = scalar_lea.vmem [#allocation5], %s502
    %v504 = vld [vmem:[%s503] sm:$0xff]
    %s505 = scalar_lea.vmem [#allocation2], %s502
    %v506 = vld [vmem:[%s505] sm:$0xff]
    %vm507 = vcmp.gt.f32.partialorder %v504, %v499
    %v508 = vsel %vm507, %v504, %v499
    %v509 = vsel %vm507, %v506, %v500
    %v510 = vmax.f32 %v501, %v506
    %s511 = sadd.s32 0, 136
    %s512 = scalar_lea.vmem [#allocation5], %s511
    %v513 = vld [vmem:[%s512] sm:$0xff]
    %s514 = scalar_lea.vmem [#allocation2], %s511
    %v515 = vld [vmem:[%s514] sm:$0xff]
    %vm516 = vcmp.gt.f32.partialorder %v513, %v508
    %v517 = vsel %vm516, %v513, %v508
    %v518 = vsel %vm516, %v515, %v509
    %v519 = vmax.f32 %v510, %v515
    %s520 = sadd.s32 0, 144
    %s521 = scalar_lea.vmem [#allocation5], %s520
    %v522 = vld [vmem:[%s521] sm:$0xff]
    %s523 = scalar_lea.vmem [#allocation2], %s520
    %v524 = vld [vmem:[%s523] sm:$0xff]
    %vm525 = vcmp.gt.f32.partialorder %v522, %v517
    %v526 = vsel %vm525, %v522, %v517
    %v527 = vsel %vm525, %v524, %v518
    %v528 = vmax.f32 %v519, %v524
    %s529 = sadd.s32 0, 152
    %s530 = scalar_lea.vmem [#allocation5], %s529
    %v531 = vld [vmem:[%s530] sm:$0xff]
    %s532 = scalar_lea.vmem [#allocation2], %s529
    %v533 = vld [vmem:[%s532] sm:$0xff]
    %vm534 = vcmp.gt.f32.partialorder %v531, %v526
    %v535 = vsel %vm534, %v533, %v527
    %v536 = vmax.f32 %v528, %v533
    %v537 = vsub.f32 %v365, %v536
    %v538 = vmul.f32 %v537, 1.442695
    %v539 = vpow.pop %v538
    %v540 = vadd.f32 %v539, 0.0
    %v541 = vsub.f32 %v371, %v536
    %v542 = vmul.f32 %v541, 1.442695
    %v543 = vpow.pop %v542
    %v544 = vadd.f32 %v540, %v543
    %v545 = vsub.f32 %v380, %v536
    %v546 = vmul.f32 %v545, 1.442695
    %v547 = vpow.pop %v546
    %v548 = vadd.f32 %v544, %v547
    %v549 = vsub.f32 %v389, %v536
    %v550 = vmul.f32 %v549, 1.442695
    %v551 = vpow.pop %v550
    %v552 = vadd.f32 %v548, %v551
    %v553 = vsub.f32 %v398, %v536
    %v554 = vmul.f32 %v553, 1.442695
    %v555 = vpow.pop %v554
    %v556 = vadd.f32 %v552, %v555
    %v557 = vsub.f32 %v407, %v536
    %v558 = vmul.f32 %v557, 1.442695
    %v559 = vpow.pop %v558
    %v560 = vadd.f32 %v556, %v559
    %v561 = vsub.f32 %v416, %v536
    %v562 = vmul.f32 %v561, 1.442695
    %v563 = vpow.pop %v562
    %v564 = vadd.f32 %v560, %v563
    %v565 = vsub.f32 %v425, %v536
    %v566 = vmul.f32 %v565, 1.442695
    %v567 = vpow.pop %v566
    %v568 = vadd.f32 %v564, %v567
    %v569 = vsub.f32 %v434, %v536
    %v570 = vmul.f32 %v569, 1.442695
    %v571 = vpow.pop %v570
    %v572 = vadd.f32 %v568, %v571
    %v573 = vsub.f32 %v443, %v536
    %v574 = vmul.f32 %v573, 1.442695
    %v575 = vpow.pop %v574
    %v576 = vadd.f32 %v572, %v575
    %v577 = vsub.f32 %v452, %v536
    %v578 = vmul.f32 %v577, 1.442695
    %v579 = vpow.pop %v578
    %v580 = vadd.f32 %v576, %v579
    %v581 = vsub.f32 %v461, %v536
    %v582 = vmul.f32 %v581, 1.442695
    %v583 = vpow.pop %v582
    %v584 = vadd.f32 %v580, %v583
    %v585 = vsub.f32 %v470, %v536
    %v586 = vmul.f32 %v585, 1.442695
    %v587 = vpow.pop %v586
    %v588 = vadd.f32 %v584, %v587
    %v589 = vsub.f32 %v479, %v536
    %v590 = vmul.f32 %v589, 1.442695
    %v591 = vpow.pop %v590
    %v592 = vadd.f32 %v588, %v591
    %v593 = vsub.f32 %v488, %v536
    %v594 = vmul.f32 %v593, 1.442695
    %v595 = vpow.pop %v594
    %v596 = vadd.f32 %v592, %v595
    %v597 = vsub.f32 %v497, %v536
    %v598 = vmul.f32 %v597, 1.442695
    %v599 = vpow.pop %v598
    %v600 = vadd.f32 %v596, %v599
    %v601 = vsub.f32 %v506, %v536
    %v602 = vmul.f32 %v601, 1.442695
    %v603 = vpow.pop %v602
    %v604 = vadd.f32 %v600, %v603
    %v605 = vsub.f32 %v515, %v536
    %v606 = vmul.f32 %v605, 1.442695
    %v607 = vpow.pop %v606
    %v608 = vadd.f32 %v604, %v607
    %v609 = vsub.f32 %v524, %v536
    %v610 = vmul.f32 %v609, 1.442695
    %v611 = vpow.pop %v610
    %v612 = vadd.f32 %v608, %v611
    %v613 = vsub.f32 %v533, %v536
    %v614 = vmul.f32 %v613, 1.442695
    %v615 = vpow.pop %v614
    %v616 = vadd.f32 %v612, %v615
    %v617 = vlog2.pop %v616
    %v618 = vmul.f32 %v617, 0.6931472
    %v619 = vadd.f32 %v536, %v618
    %v620 = vsub.f32 %v619, %v535
    %v621 = vmul.f32 %v190, %v620
    %v622 = vadd.f32 %v364, %v621
    %v623 = vadd.f32 %v622, 0.0
    %624 = vst [vmem:[#allocation7] sm:$0xff] %v623
    // Predicated region
    $region18: #{tpu_custom_call.1} parent=1 // pred_check
      _
    $region19: #{tpu_custom_call.1} parent=1 // pred_check_branch
      %626 = sbr.rel (0) target = $region21
    $region20: #{tpu_custom_call.1} parent=1 // pred_region
      %628 = vsyncadd [#allocation4], 0
      %s630 = sshll.u32 [#allocation7], 4
      %s631 = int_to_ptr.vmem [resolvable:$true] %s630
      %s632 = sshll.u32 %s2, 4
      %s633 = int_to_ptr.hbm [resolvable:$true] %s632
      %635 = dma.vmem_to_hbm [thread:$0]  %s631, 128, %s633, [#allocation4]
    $region21: #{tpu_custom_call.1} parent=1 // pred_fallthru
      _
    // Predicated region
    $region22: #{tpu_custom_call.1} parent=1 // pred_check
      _
    $region23: #{tpu_custom_call.1} parent=1 // pred_check_branch
      %637 = sbr.rel (0) target = $region25
    $region24: #{tpu_custom_call.1} parent=1 // pred_region
      %639 = dma.done [#allocation4], 128
    $region25: #{tpu_custom_call.1} parent=1 // pred_fallthru
      _
    %640 = vsyncpa [#allocation3], 1
    %641 = vsyncpa [#allocation6], 1
    %642 = vsyncpa [#allocation4], 1

</llo_original>
